<compile_context>
chip_gen: v5e
topology: v5e:2x2
jax: 0.10.0
libtpu: 0.0.40
codegen_flags: <defaults>
</compile_context>

<pallas_src>
import functools
import math

import jax
import jax.numpy as jnp
from jax.experimental import pallas as pl
from jax.experimental.pallas import tpu as pltpu


def _round_up(x, m):
    return (x + m - 1) // m * m


def _fit_tile(dim, max_tile, align):
    """Largest tile <= max_tile that divides `dim` and is a multiple of `align`.
    Assumes dim % align == 0."""
    if dim <= max_tile:
        return dim
    n = -(-dim // max_tile)
    while dim % n != 0 or (dim // n) % align != 0:
        n += 1
    return dim // n


def _detect_single_tc():
    """True for single-TensorCore chips (v5e / v6e); False otherwise (v7x, v4/v5p, unknown)."""
    try:
        kind = jax.devices()[0].device_kind.lower()
    except Exception:
        return False
    for tag in ("v5e", "v5 lite", "v5lite", "v6e", "v6 lite", "v6lite"):
        if tag in kind:
            return True
    return False


_SINGLE_TC = _detect_single_tc()
# v7x: 64 MiB VMEM per TC -> stay at 40 MiB.  v5e/v6e: 128 MiB -> 80 MiB.
_VMEM_LIMIT = (80 if _SINGLE_TC else 40) * 1024 * 1024
_TK_CAP = 8192 if _SINGLE_TC else 4096     # bigger K-tiles amortize per-step overhead
_TN_CAP = 2048 if _SINGLE_TC else 1024     # keep >=2 N-blocks for the v7x megacore


# ---------------------------------------------------------------------------
# Generic tiled matmul:  out = act(x @ w + b)     (w bf16, f32 accumulation)
# ---------------------------------------------------------------------------
def _matmul_kernel(x_ref, w_ref, b_ref, o_ref, acc_ref, *, act):
    k = pl.program_id(2)

    @pl.when(k == 0)
    def _():
        acc_ref[...] = jnp.zeros_like(acc_ref)

    xv = x_ref[...]
    wv = w_ref[...]
    if xv.dtype != wv.dtype:
        xv = xv.astype(wv.dtype)          # bf16 x bf16 -> bf16 MXU path
    acc_ref[...] += jnp.dot(xv, wv, preferred_element_type=jnp.float32)

    @pl.when(k == pl.num_programs(2) - 1)
    def _():
        r = acc_ref[...] + b_ref[...].astype(jnp.float32)
        if act == "relu":
            r = jnp.maximum(r, 0.0)
        o_ref[...] = r.astype(o_ref.dtype)


def _matmul_1k_kernel(x_ref, w_ref, b_ref, o_ref, *, act):
    """Single-K-step specialization: no accumulator scratch round-trip."""
    xv = x_ref[...]
    wv = w_ref[...]
    if xv.dtype != wv.dtype:
        xv = xv.astype(wv.dtype)
    r = jnp.dot(xv, wv, preferred_element_type=jnp.float32) + b_ref[...].astype(jnp.float32)
    if act == "relu":
        r = jnp.maximum(r, 0.0)
    o_ref[...] = r.astype(o_ref.dtype)


def linear_pallas(x, w, b, act="none"):
    """x: (M, K) f32, w: (K, N) (bf16 or f32), b: (N,) f32 -> (M, N) f32."""
    M, K = x.shape
    _, N = w.shape

    # Row tiling: exact divisor of M when possible (no pad / no slice copy).
    tm_max = 2048 if (K <= 512 and N <= 128) else 256   # skinny conv matmuls
    if M % 8 == 0:
        tm = _fit_tile(M, tm_max, 8)
        Mp = M
        xp = x
    else:
        Mp = _round_up(M, 8)
        tm = min(Mp, tm_max)
        Mp = _round_up(Mp, tm)
        xp = jnp.pad(x, ((0, Mp - M), (0, 0)))

    # K tiling: full-extent block for small / unaligned K, else aligned divisor.
    if K % 128 == 0 and K > _TK_CAP:
        tk = _fit_tile(K, _TK_CAP, 128)
    else:
        tk = K                             # block == full K (always legal)

    # N tiling: full-extent for unaligned (small) N, else generation-capped.
    if N % 128 == 0:
        tn = _fit_tile(N, _TN_CAP, 128)
    else:
        tn = N

    # Megacore split: if the grid would have no parallel axis with extent >= 2
    # (e.g. fc1: M tiny, N == tn), split N so both v7x TensorCores stream
    # half the weights.  Skipped on single-TC chips (would only add overhead).
    if (not _SINGLE_TC) and Mp // tm == 1 and N // tn == 1 and N % 256 == 0:
        tn = N // 2

    bp = b.reshape(1, N)
    nk = K // tk

    if nk == 1:
        out = pl.pallas_call(
            functools.partial(_matmul_1k_kernel, act=act),
            out_shape=jax.ShapeDtypeStruct((Mp, N), jnp.float32),
            grid=(Mp // tm, N // tn),
            in_specs=[
                pl.BlockSpec((tm, K), lambda i, j: (i, 0)),
                pl.BlockSpec((K, tn), lambda i, j: (0, j)),
                pl.BlockSpec((1, tn), lambda i, j: (0, j)),
            ],
            out_specs=pl.BlockSpec((tm, tn), lambda i, j: (i, j)),
            compiler_params=pltpu.CompilerParams(
                dimension_semantics=("parallel", "parallel"),
                vmem_limit_bytes=_VMEM_LIMIT),
        )(xp, w, bp)
    else:
        out = pl.pallas_call(
            functools.partial(_matmul_kernel, act=act),
            out_shape=jax.ShapeDtypeStruct((Mp, N), jnp.float32),
            grid_spec=pltpu.PrefetchScalarGridSpec(
                num_scalar_prefetch=0,
                grid=(Mp // tm, N // tn, nk),
                in_specs=[
                    pl.BlockSpec((tm, tk), lambda i, j, k: (i, k)),
                    pl.BlockSpec((tk, tn), lambda i, j, k: (k, j)),
                    pl.BlockSpec((1, tn), lambda i, j, k: (0, j)),
                ],
                out_specs=pl.BlockSpec((tm, tn), lambda i, j, k: (i, j)),
                scratch_shapes=[pltpu.VMEM((tm, tn), jnp.float32)],
            ),
            compiler_params=pltpu.CompilerParams(
                dimension_semantics=("parallel", "parallel", "arbitrary"),
                vmem_limit_bytes=_VMEM_LIMIT),
        )(xp, w, bp)
    return out[:M] if Mp != M else out


# ---------------------------------------------------------------------------
# Grouped (per-group weights) linear: out[g] = act(x[g] @ w[g] + b[g])
# Several groups are processed per grid step (batched einsum).
# ---------------------------------------------------------------------------
def _bmm_kernel(x_ref, w_ref, b_ref, o_ref, *, act):
    xv = x_ref[...]
    wv = w_ref[...]
    if xv.dtype != wv.dtype:
        xv = xv.astype(wv.dtype)
    r = jnp.einsum("gmk,gkn->gmn", xv, wv,
                   preferred_element_type=jnp.float32) + b_ref[...].astype(jnp.float32)
    if act == "relu":
        r = jnp.maximum(r, 0.0)
    o_ref[...] = r.astype(o_ref.dtype)


def grouped_linear_pallas(x, w, b, act="none"):
    """x: (G, M, K) f32, w: (G, K, N) bf16, b: (G, N) f32 -> (G, M, N) f32."""
    G, M, K = x.shape
    _, _, N = w.shape
    if M % 8 == 0:
        Mp, xp = M, x
    else:
        Mp = _round_up(M, 8)
        xp = jnp.pad(x, ((0, 0), (0, Mp - M), (0, 0)))
    Gb = 1
    for c in (8, 4, 2):
        if G % c == 0:
            Gb = c
            break
    bp = b.reshape(G, 1, N)
    out = pl.pallas_call(
        functools.partial(_bmm_kernel, act=act),
        out_shape=jax.ShapeDtypeStruct((G, Mp, N), jnp.float32),
        grid=(G // Gb,),
        in_specs=[
            pl.BlockSpec((Gb, Mp, K), lambda g: (g, 0, 0)),
            pl.BlockSpec((Gb, K, N), lambda g: (g, 0, 0)),
            pl.BlockSpec((Gb, 1, N), lambda g: (g, 0, 0)),
        ],
        out_specs=pl.BlockSpec((Gb, Mp, N), lambda g: (g, 0, 0)),
        compiler_params=pltpu.CompilerParams(dimension_semantics=("parallel",)),
    )(xp, w, bp)
    return out[:, :M, :] if Mp != M else out


# ---------------------------------------------------------------------------
# Fused single-head attention over a batch of independent heads
# (8 heads per grid step; bf16 MXU matmuls with f32 accumulation).
# ---------------------------------------------------------------------------
def _attn_kernel(q_ref, k_ref, v_ref, o_ref, *, scale):
    q = q_ref[...].astype(jnp.bfloat16)
    k = k_ref[...].astype(jnp.bfloat16)
    v = v_ref[...].astype(jnp.bfloat16)
    s = jnp.einsum("hqd,hkd->hqk", q, k,
                   preferred_element_type=jnp.float32) * scale
    m = jnp.max(s, axis=-1, keepdims=True)
    p = jnp.exp(s - m)
    l = jnp.sum(p, axis=-1, keepdims=True)
    o = jnp.einsum("hqk,hkd->hqd", p.astype(jnp.bfloat16), v,
                   preferred_element_type=jnp.float32)
    o_ref[...] = (o / l).astype(o_ref.dtype)      # exact softmax denominator


def attention_pallas(q, k, v, scale):
    """q, k, v: (B, L, D) independent heads -> softmax(q k^T * scale) v."""
    B, L, D = q.shape
    Hb = 1
    for c in (8, 4, 2):
        if B % c == 0:
            Hb = c
            break
    spec = pl.BlockSpec((Hb, L, D), lambda b: (b, 0, 0))
    return pl.pallas_call(
        functools.partial(_attn_kernel, scale=scale),
        out_shape=jax.ShapeDtypeStruct((B, L, D), jnp.float32),
        grid=(B // Hb,),
        in_specs=[spec, spec, spec],
        out_specs=pl.BlockSpec((Hb, L, D), lambda b: (b, 0, 0)),
        compiler_params=pltpu.CompilerParams(dimension_semantics=("parallel",)),
    )(q, k, v)


# ---------------------------------------------------------------------------
# LayerNorm(x + residual) over the last dim.
# ---------------------------------------------------------------------------
def _ln_res_kernel(x_ref, r_ref, g_ref, b_ref, o_ref, *, eps):
    x = x_ref[...].astype(jnp.float32) + r_ref[...].astype(jnp.float32)
    mu = jnp.mean(x, axis=-1, keepdims=True)
    xc = x - mu
    var = jnp.mean(xc * xc, axis=-1, keepdims=True)
    y = xc * jax.lax.rsqrt(var + eps)
    o_ref[...] = (y * g_ref[...] + b_ref[...]).astype(o_ref.dtype)


def layernorm_residual_pallas(x, r, g, b, eps=1e-5):
    """LayerNorm(x + r); x, r: (R, D)."""
    R, D = x.shape
    return pl.pallas_call(
        functools.partial(_ln_res_kernel, eps=eps),
        out_shape=jax.ShapeDtypeStruct((R, D), x.dtype),
        grid=(1,),
        in_specs=[
            pl.BlockSpec((R, D), lambda i: (0, 0)),
            pl.BlockSpec((R, D), lambda i: (0, 0)),
            pl.BlockSpec((1, D), lambda i: (0, 0)),
            pl.BlockSpec((1, D), lambda i: (0, 0)),
        ],
        out_specs=pl.BlockSpec((R, D), lambda i: (0, 0)),
    )(x, r, g.reshape(1, D), b.reshape(1, D))


# ---------------------------------------------------------------------------
# MaxPool2d(kernel=2, stride=2): elementwise max of the 4 strided views,
# lane-dense (512 lanes) with up-to-512-row tiles.
# ---------------------------------------------------------------------------
def _max4_kernel(a_ref, b_ref, c_ref, d_ref, o_ref):
    o_ref[...] = jnp.maximum(jnp.maximum(a_ref[...], b_ref[...]),
                             jnp.maximum(c_ref[...], d_ref[...]))


def maxpool2x2_pallas(x):
    """x: (N, C, H, W) -> (N, C, H//2, W//2)."""
    # TODO(synk): fully-fused conv+pool (in-kernel im2col / pooling) left as
    # future work; this keeps the XLA-side strided views but uses one wide,
    # lane-dense Pallas kernel for the max.
    N, C, H, W = x.shape
    Ho, Wo = H // 2, W // 2
    xs = x[:, :, :2 * Ho, :2 * Wo]
    parts = [xs[:, :, di::2, dj::2] for di in (0, 1) for dj in (0, 1)]
    n = N * C * Ho * Wo
    width = 512
    rows = _round_up(-(-n // width), 8)
    tile_rows = _fit_tile(rows, 512, 8)

    def flat(t):
        t = t.reshape(-1)
        return jnp.pad(t, (0, rows * width - n)).reshape(rows, width)

    out = pl.pallas_call(
        _max4_kernel,
        out_shape=jax.ShapeDtypeStruct((rows, width), x.dtype),
        grid=(rows // tile_rows,),
        in_specs=[pl.BlockSpec((tile_rows, width), lambda i: (i, 0))] * 4,
        out_specs=pl.BlockSpec((tile_rows, width), lambda i: (i, 0)),
        compiler_params=pltpu.CompilerParams(dimension_semantics=("parallel",)),
    )(*[flat(t) for t in parts])
    return out.reshape(-1)[:n].reshape(N, C, Ho, Wo)


# ---------------------------------------------------------------------------
# Softmax over the last dim.
# ---------------------------------------------------------------------------
def _softmax_kernel(x_ref, o_ref):
    x = x_ref[...].astype(jnp.float32)
    m = jnp.max(x, axis=-1, keepdims=True)
    e = jnp.exp(x - m)
    o_ref[...] = (e / jnp.sum(e, axis=-1, keepdims=True)).astype(o_ref.dtype)


def softmax_pallas(x):
    R, D = x.shape
    Rp, Dp = _round_up(R, 8), _round_up(D, 128)
    xp = jnp.pad(x, ((0, Rp - R), (0, Dp - D)), constant_values=-1e30)
    out = pl.pallas_call(
        _softmax_kernel,
        out_shape=jax.ShapeDtypeStruct((Rp, Dp), x.dtype),
        grid=(1,),
        in_specs=[pl.BlockSpec((Rp, Dp), lambda i: (0, 0))],
        out_specs=pl.BlockSpec((Rp, Dp), lambda i: (0, 0)),
    )(xp)
    return out[:R, :D]


# ---------------------------------------------------------------------------
# Conv2d 3x3 stride 1 (no padding) via im2col + Pallas matmul (no K/N pad).
# ---------------------------------------------------------------------------
def conv2d_3x3_pallas(x, w, b):
    """x: (N, C, H, W) NCHW, w: (Cout, Cin, 3, 3), b: (Cout,)."""
    # TODO(synk): in-kernel im2col (shift via index_map over NCHW) would remove
    # this XLA-side patch materialization; kept host-side for robustness.
    N, C, H, W = x.shape
    Cout = w.shape[0]
    Ho, Wo = H - 2, W - 2
    cols = []
    for i in range(3):
        for j in range(3):
            cols.append(x[:, :, i:i + Ho, j:j + Wo])
    p = jnp.stack(cols, axis=2)              # (N, C, 9, Ho, Wo)
    p = p.transpose(0, 3, 4, 1, 2)           # (N, Ho, Wo, C, 9)
    p = p.reshape(N * Ho * Wo, C * 9)
    wf = w.reshape(Cout, C * 9).T            # (C*9, Cout)
    y = linear_pallas(p, wf, b)              # matmul hot path in Pallas
    return y.reshape(N, Ho, Wo, Cout).transpose(0, 3, 1, 2)


# ---------------------------------------------------------------------------
# Parameter init (deterministic, synthetic).  Matmul weights stored in bf16.
# ---------------------------------------------------------------------------
def _uniform(key, shape, scale, dtype=jnp.float32):
    return jax.random.uniform(key, shape, jnp.float32, -scale, scale).astype(dtype)


_BF16 = jnp.bfloat16
# TODO(synk): int8 weight quantization for v5e (native int8 MXU) not implemented.


def init_params(key):
    ki = iter(jax.random.split(key, 64))
    p = {}
    s = 1.0 / math.sqrt(1 * 9)
    p["conv1_w"] = _uniform(next(ki), (32, 1, 3, 3), s, _BF16)
    p["conv1_b"] = _uniform(next(ki), (32,), s)
    s = 1.0 / math.sqrt(32 * 9)
    p["conv2_w"] = _uniform(next(ki), (32, 32, 3, 3), s, _BF16)
    p["conv2_b"] = _uniform(next(ki), (32,), s)
    # SeparateLinear: 16 x Linear(6, 16), stored (G, in, out)
    s = 1.0 / math.sqrt(6)
    p["expand_w"] = _uniform(next(ki), (16, 6, 16), s, _BF16)
    p["expand_b"] = _uniform(next(ki), (16, 16), s)
    # 16 x MultiheadAttention(96, 1 head)
    s = 1.0 / math.sqrt(96)
    p["mini_in_w"] = _uniform(next(ki), (16, 96, 288), s, _BF16)
    p["mini_in_b"] = _uniform(next(ki), (16, 288), s)
    p["mini_out_w"] = _uniform(next(ki), (16, 96, 96), s, _BF16)
    p["mini_out_b"] = _uniform(next(ki), (16, 96), s)
    # lin_bef_encod: Linear(3072, 2048)
    s = 1.0 / math.sqrt(3072)
    p["lin_bef_w"] = _uniform(next(ki), (3072, 2048), s, _BF16)
    p["lin_bef_b"] = _uniform(next(ki), (2048,), s)
    # TransformerEncoder: 2 x TransformerEncoderLayer(d=2048, nhead=16, ff=2048)
    layers = []
    for _ in range(2):
        lp = {}
        s = 1.0 / math.sqrt(2048)
        lp["in_w"] = _uniform(next(ki), (2048, 6144), s, _BF16)
        lp["in_b"] = _uniform(next(ki), (6144,), s)
        lp["out_w"] = _uniform(next(ki), (2048, 2048), s, _BF16)
        lp["out_b"] = _uniform(next(ki), (2048,), s)
        lp["ff1_w"] = _uniform(next(ki), (2048, 2048), s, _BF16)
        lp["ff1_b"] = _uniform(next(ki), (2048,), s)
        lp["ff2_w"] = _uniform(next(ki), (2048, 2048), s, _BF16)
        lp["ff2_b"] = _uniform(next(ki), (2048,), s)
        lp["ln1_g"] = jnp.ones((2048,), jnp.float32)
        lp["ln1_b"] = jnp.zeros((2048,), jnp.float32)
        lp["ln2_g"] = jnp.ones((2048,), jnp.float32)
        lp["ln2_b"] = jnp.zeros((2048,), jnp.float32)
        layers.append(lp)
    p["encoder_layers"] = layers
    # full_con MLP
    for name, (fi, fo) in {"fc1": (16 * 2048, 1024), "fc2": (1024, 512),
                           "fc3": (512, 128), "fc4": (128, 25)}.items():
        s = 1.0 / math.sqrt(fi)
        p[name + "_w"] = _uniform(next(ki), (fi, fo), s, _BF16)
        p[name + "_b"] = _uniform(next(ki), (fo,), s)
    return p


# ---------------------------------------------------------------------------
# TransformerEncoderLayer (post-norm, relu, inference — dropout omitted).
# ---------------------------------------------------------------------------
def encoder_layer(src, lp):
    L, B, E = src.shape
    H = 16
    Dh = E // H
    x2 = src.reshape(L * B, E)
    qkv = linear_pallas(x2, lp["in_w"], lp["in_b"])          # (L*B, 3E)
    qkv = qkv.reshape(L, B, 3 * E)
    q, k, v = qkv[..., :E], qkv[..., E:2 * E], qkv[..., 2 * E:]

    def to_heads(t):  # (L, B, E) -> (B*H, L, Dh), matching torch's head split
        return t.reshape(L, B * H, Dh).transpose(1, 0, 2)

    ah = attention_pallas(to_heads(q), to_heads(k), to_heads(v),
                          scale=1.0 / math.sqrt(Dh))          # (B*H, L, Dh)
    ah = ah.transpose(1, 0, 2).reshape(L * B, E)
    attn_out = linear_pallas(ah, lp["out_w"], lp["out_b"])    # (L*B, E)
    # TODO(synk): encoder dropout (p=0.1) omitted — inference semantics.
    # TODO(synk): LN-residual fusion into the matmul epilogue / cross-call
    # weight prefetch (hide DMA-idle gaps) left as future work.
    x = layernorm_residual_pallas(x2, attn_out, lp["ln1_g"], lp["ln1_b"])
    h = linear_pallas(x, lp["ff1_w"], lp["ff1_b"], act="relu")
    h = linear_pallas(h, lp["ff2_w"], lp["ff2_b"])
    x = layernorm_residual_pallas(x, h, lp["ln2_g"], lp["ln2_b"])
    return x.reshape(L, B, E)


# ---------------------------------------------------------------------------
# Full forward, mirroring Attensat.forward (all reshapes are raw, as in torch).
# ---------------------------------------------------------------------------
def attensat_forward(params, x):
    bs = x.shape[0]
    # slice 128x128 into 16 patches of 32x32
    sliced = x.reshape(bs, 4, 32, 4, 32).transpose(0, 1, 3, 2, 4)
    sliced = sliced.reshape(bs, 16, 32, 32)
    u = sliced.reshape(bs * 16, 1, 32, 32)

    u = conv2d_3x3_pallas(u, params["conv1_w"], params["conv1_b"])  # (bs*16,32,30,30)
    u = maxpool2x2_pallas(u)                                        # (bs*16,32,15,15)
    u = conv2d_3x3_pallas(u, params["conv2_w"], params["conv2_b"])  # (bs*16,32,13,13)
    u = maxpool2x2_pallas(u)                                        # (bs*16,32,6,6)
    u = u.reshape(bs, 16, 32, 6, 6)

    # SeparateLinear(16, 6, 16): raw reshape to (16, bs, 32, 6, 6), per-i Linear(6,16)
    u = u.reshape(16, bs, 32, 6, 6).reshape(16, bs * 32 * 6, 6)
    u = grouped_linear_pallas(u, params["expand_w"], params["expand_b"],
                              act="relu")                           # relu fused (elementwise)
    u = u.reshape(bs, 16, 32, 6, 16)
    u = u.reshape(bs, 16, 32, 96)

    # 16 mini multi-head attentions (embed 96, 1 head); q = k = v
    u = u.reshape(16, bs, 32, 6, 16)
    X = u.reshape(16, 32, bs, 96)                    # per-i u[i].reshape(32, bs, 96)
    qkv = grouped_linear_pallas(X.reshape(16, 32 * bs, 96),
                                params["mini_in_w"], params["mini_in_b"])
    qkv = qkv.reshape(16, 32, bs, 288)
    q = qkv[..., 0:96].transpose(0, 2, 1, 3).reshape(16 * bs, 32, 96)
    k = qkv[..., 96:192].transpose(0, 2, 1, 3).reshape(16 * bs, 32, 96)
    v = qkv[..., 192:288].transpose(0, 2, 1, 3).reshape(16 * bs, 32, 96)
    # TODO(synk): MultiheadAttention dropout (p=0.2 on attn weights) omitted — inference semantics.
    ao = attention_pallas(q, k, v, scale=1.0 / math.sqrt(96.0))     # (16*bs, 32, 96)
    ao = ao.reshape(16, bs, 32, 96).transpose(0, 2, 1, 3).reshape(16, 32 * bs, 96)
    ao = grouped_linear_pallas(ao, params["mini_out_w"], params["mini_out_b"])
    u = ao.reshape(16, 32, bs, 96)                   # == torch.stack(attented)
    u = u.reshape(bs, 16, 32, 96).reshape(bs, 16, 3072)

    # lin_bef_encod + relu
    u = linear_pallas(u.reshape(bs * 16, 3072),
                      params["lin_bef_w"], params["lin_bef_b"], act="relu")
    u = u.reshape(bs, 16, 2048).reshape(16, bs, 2048)

    # TransformerEncoder (2 layers, post-norm)
    for lp in params["encoder_layers"]:
        u = encoder_layer(u, lp)

    # full_con head
    u = u.reshape(bs, 16 * 2048)
    h = linear_pallas(u, params["fc1_w"], params["fc1_b"], act="relu")
    h = linear_pallas(h, params["fc2_w"], params["fc2_b"], act="relu")
    h = linear_pallas(h, params["fc3_w"], params["fc3_b"], act="relu")
    h = linear_pallas(h, params["fc4_w"], params["fc4_b"])
    return softmax_pallas(h)

# TODO(synk): `nn.LinearNorm(())` is not a real PyTorch module and is unused in
# forward; `feat_encode` Linear(6,16) is also unused in forward — both skipped.


if __name__ == "__main__":
    key = jax.random.PRNGKey(0)
    xkey, pkey = jax.random.split(key)
    x = jax.random.normal(xkey, (2, 128, 128), jnp.float32)   # input: (bs, 128, 128)
    params = init_params(pkey)
    out = attensat_forward(params, x)
    out = jax.block_until_ready(out)
    assert out.shape == (2, 25), out.shape
    assert bool(jnp.all(jnp.isfinite(out)))
    assert bool(jnp.allclose(jnp.sum(out, axis=-1), 1.0, atol=1e-4))
    print("KERNEL_OK")
</pallas_src>

<mosaic_0001>
module attributes {stable_mosaic.version = 11 : i64} {
  func.func @_matmul_1k_kernel(%arg0: i32, %arg1: i32, %arg2: memref<1920x9xf32, #tpu.memory_space<vmem>>, %arg3: memref<9x32xbf16, #tpu.memory_space<vmem>>, %arg4: memref<1x32xf32, #tpu.memory_space<vmem>>, %arg5: memref<1920x32xf32, #tpu.memory_space<vmem>>) attributes {dimension_semantics = [#tpu.dimension_semantics<parallel>, #tpu.dimension_semantics<parallel>], iteration_bounds = array<i64: 15, 1>, scalar_prefetch = 0 : i64, scratch_operands = 0 : i64, tpu.core_type = #tpu.core_type<tc>, window_params = [{transform_indices = @transform_0, window_bounds = array<i64: 1920, 9>}, {transform_indices = @transform_1, window_bounds = array<i64: 9, 32>}, {transform_indices = @transform_2, window_bounds = array<i64: 1, 32>}, {transform_indices = @transform_3, window_bounds = array<i64: 1920, 32>}]} {
    %c0 = arith.constant 0 : index
    %c0_0 = arith.constant 0 : index
    %0 = vector.load %arg2[%c0, %c0_0] : memref<1920x9xf32, #tpu.memory_space<vmem>>, vector<1920x9xf32>
    %c0_1 = arith.constant 0 : index
    %c0_2 = arith.constant 0 : index
    %1 = vector.load %arg3[%c0_1, %c0_2] : memref<9x32xbf16, #tpu.memory_space<vmem>>, vector<9x32xbf16>
    %2 = arith.truncf %0 : vector<1920x9xf32> to vector<1920x9xbf16>
    %cst = arith.constant dense<0.000000e+00> : vector<1920x32xf32>
    %3 = tpu.matmul %2, %1, %cst {dimension_numbers = #tpu.dot_dimension_numbers<[1], [0], [0], [1], [0, 0, 1, 1], [], []>} : vector<1920x9xbf16>, vector<9x32xbf16>, vector<1920x32xf32> -> vector<1920x32xf32>
    %c0_3 = arith.constant 0 : index
    %c0_4 = arith.constant 0 : index
    %4 = vector.load %arg4[%c0_3, %c0_4] : memref<1x32xf32, #tpu.memory_space<vmem>>, vector<1x32xf32>
    %5 = vector.broadcast %4 : vector<1x32xf32> to vector<1920x32xf32>
    %6 = arith.addf %3, %5 : vector<1920x32xf32>
    %c0_5 = arith.constant 0 : index
    %c0_6 = arith.constant 0 : index
    %7 = vector.load %arg5[%c0_5, %c0_6] : memref<1920x32xf32, #tpu.memory_space<vmem>>, vector<1920x32xf32>
    tpu.vector_store %arg5[%c0_5, %c0_6], %6 {strides = array<i32>} : memref<1920x32xf32, #tpu.memory_space<vmem>>, vector<1920x32xf32>,
    return
  }
  func.func @transform_0(%arg0: i32, %arg1: i32) -> (i32, i32) {
    %c0_i32 = arith.constant 0 : i32
    %c0_i32_0 = arith.constant 0 : i32
    return %arg0, %c0_i32 : i32, i32
  }
  func.func @transform_1(%arg0: i32, %arg1: i32) -> (i32, i32) {
    %c0_i32 = arith.constant 0 : i32
    %c0_i32_0 = arith.constant 0 : i32
    return %c0_i32, %arg1 : i32, i32
  }
  func.func @transform_2(%arg0: i32, %arg1: i32) -> (i32, i32) {
    %c0_i32 = arith.constant 0 : i32
    %c0_i32_0 = arith.constant 0 : i32
    return %c0_i32, %arg1 : i32, i32
  }
  func.func @transform_3(%arg0: i32, %arg1: i32) -> (i32, i32) {
    %c0_i32 = arith.constant 0 : i32
    return %arg0, %arg1 : i32, i32
  }
}

</mosaic_0001>

<llo_original>
// kernel: tpu_custom_call.1
$region0: #{tpu_custom_call.1}
  #allocation0 [shape = 'u32[]', space=smem, size = 0x4, offset = 0x4, fixed_abs, tag = 'smem constant byte address 0x4 - core index']
  #allocation1 [shape = 'u32[72,128]{1,0:T(1,128)}', space=vmem, size = 0x9000, scoped, tag = 'internal scratch']
  %s0 = inlined_call_operand.vmem [shape: f32[28800,9], index: 0, kind: input, shape index: {}]
  %s1 = inlined_call_operand.vmem [shape: bf16[9,32], index: 1, kind: input, shape index: {}]
  %s2 = inlined_call_operand.vmem [shape: f32[1,32], index: 2, kind: input, shape index: {}]
  %s3 = inlined_call_operand.vmem [shape: f32[28800,32], index: 3, kind: output, shape index: {}]
  %s4 = sld [smem:[#allocation0]]
  $region45: #{tpu_custom_call.1} parent=0
    _
  %s6 = ssub.s32 1, %s4
  %s7 = scalar_select 0, %s6, %s4
  loop: start=0, step=1, limit=17
  $region2: #{tpu_custom_call.1} parent=0 // loop_pre_header
    _
  $region3: #{tpu_custom_call.1} parent=0 // loop_header
    %s9 = sphi 0, %s13
    %p10 = scmp.ge.s32.totalorder %s9, 17
    %s16 = sphi 0, %s28
    %s17 = sphi 0, %s24
    %s18 = sphi 0, %s16
    %s19 = sphi 0, %s17
    %s20 = sphi 0, %s18
    %s21 = sphi 0, %s19
    %s31 = sphi 0, %s33
    %s34 = sphi 0, %s31
    %s35 = sphi 0, %s34
    %s51 = sphi 0, %s35
    %s57 = sphi 0, %s59
    %s60 = sphi 0, %s57
    %s61 = sphi 0, %s60
    %s77 = sphi 0, %s61
    %s83 = sphi 0, %s85
    %s86 = sphi 0, %s83
    %s87 = sphi 0, %s86
    %s103 = sphi 0, %s87
    %s111 = sphi 0, %s113
    %s114 = sphi 0, %s111
    %s115 = sphi 0, %s114
    %s131 = sphi 0, %s115
  $region4: #{tpu_custom_call.1} parent=0 // loop_header_branch
    %12 = sbr.rel (%p10) target = $region8
  $region5: #{tpu_custom_call.1} parent=0 // loop_body
    %s14 = ssub.s32 %s9, 1
    %s15 = ssub.s32 %s9, 2
    %s22 = sadd.s32 1, %s17
    %p23 = scmp.ge.s32.totalorder %s22, 1
    %s24 = scalar_select %p23, 0, %s22
    %s25 = sadd.s32 1, %s16
    %s26 = scalar_select %p23, %s25, %s16
    %p27 = scmp.ge.s32.totalorder %s26, 15
    %s28 = scalar_select %p27, 0, %s26
    %s29 = ssub.s32 %s16, %s28
    %p30 = scmp.eq.s32.totalorder %s29, 0
    %s32 = sadd.s32 %s31, 1
    %s33 = scalar_select %p30, %s31, %s32
    %p36 = pneg %p30
    %p37 = scmp.eq.s32.totalorder %s9, 14
    %p38 = por %p36, %p37
    %p39 = scmp.ne.s32.totalorder %s31, %s34
    %p40 = scmp.eq.s32.totalorder %s9, 0
    %p41 = por %p39, %p40
    %p42 = scmp.ne.s32.totalorder %s31, %s34
    %p43 = scmp.eq.s32.totalorder %s14, 14
    %p44 = por %p42, %p43
    %p45 = scmp.ne.s32.totalorder %s34, %s35
    %p46 = scmp.eq.s32.totalorder %s14, 0
    %p47 = por %p45, %p46
    %p48 = scmp.ne.s32.totalorder %s34, %s35
    %p49 = scmp.eq.s32.totalorder %s15, 14
    %p50 = por %p48, %p49
    %p52 = scmp.ne.s32.totalorder %s35, %s51
    %p53 = scmp.eq.s32.totalorder %s15, 0
    %p54 = por %p52, %p53
    %s55 = ssub.s32 %s17, %s24
    %p56 = scmp.eq.s32.totalorder %s55, 0
    %s58 = sadd.s32 %s57, 1
    %s59 = scalar_select %p56, %s57, %s58
    %p62 = pneg %p56
    %p63 = scmp.eq.s32.totalorder %s9, 14
    %p64 = por %p62, %p63
    %p65 = scmp.ne.s32.totalorder %s57, %s60
    %p66 = scmp.eq.s32.totalorder %s9, 0
    %p67 = por %p65, %p66
    %p68 = scmp.ne.s32.totalorder %s57, %s60
    %p69 = scmp.eq.s32.totalorder %s14, 14
    %p70 = por %p68, %p69
    %p71 = scmp.ne.s32.totalorder %s60, %s61
    %p72 = scmp.eq.s32.totalorder %s14, 0
    %p73 = por %p71, %p72
    %p74 = scmp.ne.s32.totalorder %s60, %s61
    %p75 = scmp.eq.s32.totalorder %s15, 14
    %p76 = por %p74, %p75
    %p78 = scmp.ne.s32.totalorder %s61, %s77
    %p79 = scmp.eq.s32.totalorder %s15, 0
    %p80 = por %p78, %p79
    %s81 = ssub.s32 %s17, %s24
    %p82 = scmp.eq.s32.totalorder %s81, 0
    %s84 = sadd.s32 %s83, 1
    %s85 = scalar_select %p82, %s83, %s84
    %p88 = pneg %p82
    %p89 = scmp.eq.s32.totalorder %s9, 14
    %p90 = por %p88, %p89
    %p91 = scmp.ne.s32.totalorder %s83, %s86
    %p92 = scmp.eq.s32.totalorder %s9, 0
    %p93 = por %p91, %p92
    %p94 = scmp.ne.s32.totalorder %s83, %s86
    %p95 = scmp.eq.s32.totalorder %s14, 14
    %p96 = por %p94, %p95
    %p97 = scmp.ne.s32.totalorder %s86, %s87
    %p98 = scmp.eq.s32.totalorder %s14, 0
    %p99 = por %p97, %p98
    %p100 = scmp.ne.s32.totalorder %s86, %s87
    %p101 = scmp.eq.s32.totalorder %s15, 14
    %p102 = por %p100, %p101
    %p104 = scmp.ne.s32.totalorder %s87, %s103
    %p105 = scmp.eq.s32.totalorder %s15, 0
    %p106 = por %p104, %p105
    %s107 = ssub.s32 %s16, %s28
    %s108 = ssub.s32 %s17, %s24
    %s109 = sor.u32 %s107, %s108
    %p110 = scmp.eq.s32.totalorder %s109, 0
    %s112 = sadd.s32 %s111, 1
    %s113 = scalar_select %p110, %s111, %s112
    %p116 = pneg %p110
    %p117 = scmp.eq.s32.totalorder %s9, 14
    %p118 = por %p116, %p117
    %p119 = scmp.ne.s32.totalorder %s111, %s114
    %p120 = scmp.eq.s32.totalorder %s9, 0
    %p121 = por %p119, %p120
    %p122 = scmp.ne.s32.totalorder %s111, %s114
    %p123 = scmp.eq.s32.totalorder %s14, 14
    %p124 = por %p122, %p123
    %p125 = scmp.ne.s32.totalorder %s114, %s115
    %p126 = scmp.eq.s32.totalorder %s14, 0
    %p127 = por %p125, %p126
    %p128 = scmp.ne.s32.totalorder %s114, %s115
    %p129 = scmp.eq.s32.totalorder %s15, 14
    %p130 = por %p128, %p129
    %p132 = scmp.ne.s32.totalorder %s115, %s131
    %p133 = scmp.eq.s32.totalorder %s15, 0
    %p134 = por %p132, %p133
    %p135 = scmp.le.s32.totalorder 1, %s9
    %p136 = scmp.lt.s32.totalorder %s9, 16
    %p137 = pnand %p135, %p136
    %p138 = pneg %p137
    // Predicated region
    $region9: #{tpu_custom_call.1} parent=5 // pred_check
      _
    $region10: #{tpu_custom_call.1} parent=5 // pred_check_branch
      %140 = sbr.rel (%p137) target = $region12
    $region11: #{tpu_custom_call.1} parent=5 // pred_region
      %s141 = ssub.s32 %s9, 1
      // Predicated region
      $region13: #{tpu_custom_call.1} parent=11 // pred_check
        %p142 = pneg %p73
      $region14: #{tpu_custom_call.1} parent=11 // pred_check_branch
        %144 = sbr.rel (%p142) target = $region16
      $region15: #{tpu_custom_call.1} parent=11 // pred_region
        %p145 = scmp.lt.s32.totalorder %s19, 0
        %s146 = scalar_select %p145, %s19, 0
        %s147 = smul.addr %s146, 4
        %s148 = scalar_lea.vmem %s1, %s147
      $region16: #{tpu_custom_call.1} parent=11 // pred_fallthru
        _
      // Predicated region
      $region17: #{tpu_custom_call.1} parent=11 // pred_check
        %p149 = pneg %p99
      $region18: #{tpu_custom_call.1} parent=11 // pred_check_branch
        %151 = sbr.rel (%p149) target = $region20
      $region19: #{tpu_custom_call.1} parent=11 // pred_region
        %p152 = scmp.lt.s32.totalorder %s19, 0
        %s153 = scalar_select %p152, %s19, 0
        %s154 = scalar_lea.vmem %s2, %s153
      $region20: #{tpu_custom_call.1} parent=11 // pred_fallthru
        _
    $region12: #{tpu_custom_call.1} parent=5 // pred_fallthru
      _
    %p155 = scmp.lt.s32.totalorder %s9, 15
    // Predicated region
    $region21: #{tpu_custom_call.1} parent=5 // pred_check
      %p156 = pneg %p155
    $region22: #{tpu_custom_call.1} parent=5 // pred_check_branch
      %158 = sbr.rel (%p156) target = $region24
    $region23: #{tpu_custom_call.1} parent=5 // pred_region
      // Predicated region
      $region25: #{tpu_custom_call.1} parent=23 // pred_check
        %p159 = pneg %p41
      $region26: #{tpu_custom_call.1} parent=23 // pred_check_branch
        %161 = sbr.rel (%p159) target = $region28
      $region27: #{tpu_custom_call.1} parent=23 // pred_region
        %s162 = smul.u32 240, %s16
        %p163 = scmp.lt.s32.totalorder %s162, 3599
        %s164 = scalar_select %p163, %s162, 3599
        %s165 = smul.addr %s164, 8
        %s166 = scalar_lea.vmem %s0, %s165
        %s167 = smul.u32 240, %s16
      $region28: #{tpu_custom_call.1} parent=23 // pred_fallthru
        _
    $region24: #{tpu_custom_call.1} parent=5 // pred_fallthru
      _
    %p168 = scmp.le.s32.totalorder 1, %s9
    %p169 = scmp.lt.s32.totalorder %s9, 16
    %p170 = pnand %p168, %p169
    %p171 = pneg %p170
    // Predicated region
    $region29: #{tpu_custom_call.1} parent=5 // pred_check
      _
    $region30: #{tpu_custom_call.1} parent=5 // pred_check_branch
      %173 = sbr.rel (%p170) target = $region32
    $region31: #{tpu_custom_call.1} parent=5 // pred_region
      %s174 = ssub.s32 %s9, 1
      %s175 = smul.u32 240, %s18
      %p176 = scmp.lt.s32.totalorder %s175, 3599
      %s177 = scalar_select %p176, %s175, 3599
      %s178 = smul.addr %s177, 8
      %s179 = scalar_lea.vmem %s0, %s178
      %p180 = pneg %p47
      %p181 = pneg %p44
      %p182 = scmp.lt.s32.totalorder %s19, 0
      %s183 = scalar_select %p182, %s19, 0
      %s184 = smul.addr %s183, 4
      %s185 = scalar_lea.vmem %s1, %s184
      %p186 = pneg %p73
      %p187 = pneg %p70
      %p188 = scmp.lt.s32.totalorder %s19, 0
      %s189 = scalar_select %p188, %s19, 0
      %s190 = scalar_lea.vmem %s2, %s189
      %p191 = pneg %p99
      %p192 = pneg %p96
      %p193 = pneg %p127
      %p194 = pneg %p124
      %s195 = smul.u32 240, %s18
      %p196 = scmp.lt.s32.totalorder %s195, 3599
      %s197 = scalar_select %p196, %s195, 3599
      %p198 = scmp.lt.s32.totalorder %s19, 0
      %s199 = scalar_select %p198, %s19, 0
      %s200 = sadd.s32 %s199, %s197
      %s201 = smul.addr %s200, 8
      %s202 = scalar_lea.vmem %s3, %s201
      %s203 = smul.u32 240, %s18
      %p204 = scmp.lt.s32.totalorder %s203, 3599
      %s205 = scalar_select %p204, %s203, 3599
      %s206 = smul.addr %s205, 8
      %s207 = scalar_lea.vmem %s0, %s206
      %s208 = smul.u32 240, %s18
      %p209 = scmp.lt.s32.totalorder %s19, 0
      %s210 = scalar_select %p209, %s19, 0
      %s211 = smul.addr %s210, 4
      %s212 = scalar_lea.vmem %s1, %s211
      %p213 = scmp.lt.s32.totalorder %s19, 0
      %s214 = scalar_select %p213, %s19, 0
      %s215 = scalar_lea.vmem %s2, %s214
      %s216 = smul.u32 240, %s18
      %p217 = scmp.lt.s32.totalorder %s216, 3599
      %s218 = scalar_select %p217, %s216, 3599
      %p219 = scmp.lt.s32.totalorder %s19, 0
      %s220 = scalar_select %p219, %s19, 0
      %s221 = sadd.s32 %s220, %s218
      %s222 = smul.addr %s221, 8
      %s223 = scalar_lea.vmem %s3, %s222
      %s224 = smul.u32 240, %s18
      %v226 = vld [vmem:[%s207] sm:$0xff]
      %v227 = vld [vmem:[%s207 + $0x8] sm:$0xff]
      %v228 = vld [vmem:[%s207 + $0x10] sm:$0xff]
      %v229 = vld [vmem:[%s207 + $0x18] sm:$0xff]
      %v230 = vld [vmem:[%s207 + $0x20] sm:$0xff]
      %v231 = vld [vmem:[%s207 + $0x28] sm:$0xff]
      %v232 = vld [vmem:[%s207 + $0x30] sm:$0xff]
      %v233 = vld [vmem:[%s207 + $0x38] sm:$0xff]
      %v234 = vld [vmem:[%s207 + $0x40] sm:$0xff]
      %v235 = vld [vmem:[%s207 + $0x48] sm:$0xff]
      %v236 = vld [vmem:[%s207 + $0x50] sm:$0xff]
      %v237 = vld [vmem:[%s207 + $0x58] sm:$0xff]
      %v238 = vld [vmem:[%s207 + $0x60] sm:$0xff]
      %v239 = vld [vmem:[%s207 + $0x68] sm:$0xff]
      %v240 = vld [vmem:[%s207 + $0x70] sm:$0xff]
      %v241 = vld [vmem:[%s207 + $0x78] sm:$0xff]
      %v242 = vld [vmem:[%s207 + $0x80] sm:$0xff]
      %v243 = vld [vmem:[%s207 + $0x88] sm:$0xff]
      %v244 = vld [vmem:[%s207 + $0x90] sm:$0xff]
      %v245 = vld [vmem:[%s207 + $0x98] sm:$0xff]
      %v246 = vld [vmem:[%s207 + $0xa0] sm:$0xff]
      %v247 = vld [vmem:[%s207 + $0xa8] sm:$0xff]
      %v248 = vld [vmem:[%s207 + $0xb0] sm:$0xff]
      %v249 = vld [vmem:[%s207 + $0xb8] sm:$0xff]
      %v250 = vld [vmem:[%s207 + $0xc0] sm:$0xff]
      %v251 = vld [vmem:[%s207 + $0xc8] sm:$0xff]
      %v252 = vld [vmem:[%s207 + $0xd0] sm:$0xff]
      %v253 = vld [vmem:[%s207 + $0xd8] sm:$0xff]
      %v254 = vld [vmem:[%s207 + $0xe0] sm:$0xff]
      %v255 = vld [vmem:[%s207 + $0xe8] sm:$0xff]
      %v256 = vld [vmem:[%s207 + $0xf0] sm:$0xff]
      %v257 = vld [vmem:[%s207 + $0xf8] sm:$0xff]
      %v258 = vld [vmem:[%s207 + $0x100] sm:$0xff]
      %v259 = vld [vmem:[%s207 + $0x108] sm:$0xff]
      %v260 = vld [vmem:[%s207 + $0x110] sm:$0xff]
      %v261 = vld [vmem:[%s207 + $0x118] sm:$0xff]
      %v262 = vld [vmem:[%s207 + $0x120] sm:$0xff]
      %v263 = vld [vmem:[%s207 + $0x128] sm:$0xff]
      %v264 = vld [vmem:[%s207 + $0x130] sm:$0xff]
      %v265 = vld [vmem:[%s207 + $0x138] sm:$0xff]
      %v266 = vld [vmem:[%s207 + $0x140] sm:$0xff]
      %v267 = vld [vmem:[%s207 + $0x148] sm:$0xff]
      %v268 = vld [vmem:[%s207 + $0x150] sm:$0xff]
      %v269 = vld [vmem:[%s207 + $0x158] sm:$0xff]
      %v270 = vld [vmem:[%s207 + $0x160] sm:$0xff]
      %v271 = vld [vmem:[%s207 + $0x168] sm:$0xff]
      %v272 = vld [vmem:[%s207 + $0x170] sm:$0xff]
      %v273 = vld [vmem:[%s207 + $0x178] sm:$0xff]
      %v274 = vld [vmem:[%s207 + $0x180] sm:$0xff]
      %v275 = vld [vmem:[%s207 + $0x188] sm:$0xff]
      %v276 = vld [vmem:[%s207 + $0x190] sm:$0xff]
      %v277 = vld [vmem:[%s207 + $0x198] sm:$0xff]
      %v278 = vld [vmem:[%s207 + $0x1a0] sm:$0xff]
      %v279 = vld [vmem:[%s207 + $0x1a8] sm:$0xff]
      %v280 = vld [vmem:[%s207 + $0x1b0] sm:$0xff]
      %v281 = vld [vmem:[%s207 + $0x1b8] sm:$0xff]
      %v282 = vld [vmem:[%s207 + $0x1c0] sm:$0xff]
      %v283 = vld [vmem:[%s207 + $0x1c8] sm:$0xff]
      %v284 = vld [vmem:[%s207 + $0x1d0] sm:$0xff]
      %v285 = vld [vmem:[%s207 + $0x1d8] sm:$0xff]
      %v286 = vld [vmem:[%s207 + $0x1e0] sm:$0xff]
      %v287 = vld [vmem:[%s207 + $0x1e8] sm:$0xff]
      %v288 = vld [vmem:[%s207 + $0x1f0] sm:$0xff]
      %v289 = vld [vmem:[%s207 + $0x1f8] sm:$0xff]
      %v290 = vld [vmem:[%s207 + $0x200] sm:$0xff]
      %v291 = vld [vmem:[%s207 + $0x208] sm:$0xff]
      %v292 = vld [vmem:[%s207 + $0x210] sm:$0xff]
      %v293 = vld [vmem:[%s207 + $0x218] sm:$0xff]
      %v294 = vld [vmem:[%s207 + $0x220] sm:$0xff]
      %v295 = vld [vmem:[%s207 + $0x228] sm:$0xff]
      %v296 = vld [vmem:[%s207 + $0x230] sm:$0xff]
      %v297 = vld [vmem:[%s207 + $0x238] sm:$0xff]
      %v298 = vld [vmem:[%s207 + $0x240] sm:$0xff]
      %v299 = vld [vmem:[%s207 + $0x248] sm:$0xff]
      %v300 = vld [vmem:[%s207 + $0x250] sm:$0xff]
      %v301 = vld [vmem:[%s207 + $0x258] sm:$0xff]
      %v302 = vld [vmem:[%s207 + $0x260] sm:$0xff]
      %v303 = vld [vmem:[%s207 + $0x268] sm:$0xff]
      %v304 = vld [vmem:[%s207 + $0x270] sm:$0xff]
      %v305 = vld [vmem:[%s207 + $0x278] sm:$0xff]
      %v306 = vld [vmem:[%s207 + $0x280] sm:$0xff]
      %v307 = vld [vmem:[%s207 + $0x288] sm:$0xff]
      %v308 = vld [vmem:[%s207 + $0x290] sm:$0xff]
      %v309 = vld [vmem:[%s207 + $0x298] sm:$0xff]
      %v310 = vld [vmem:[%s207 + $0x2a0] sm:$0xff]
      %v311 = vld [vmem:[%s207 + $0x2a8] sm:$0xff]
      %v312 = vld [vmem:[%s207 + $0x2b0] sm:$0xff]
      %v313 = vld [vmem:[%s207 + $0x2b8] sm:$0xff]
      %v314 = vld [vmem:[%s207 + $0x2c0] sm:$0xff]
      %v315 = vld [vmem:[%s207 + $0x2c8] sm:$0xff]
      %v316 = vld [vmem:[%s207 + $0x2d0] sm:$0xff]
      %v317 = vld [vmem:[%s207 + $0x2d8] sm:$0xff]
      %v318 = vld [vmem:[%s207 + $0x2e0] sm:$0xff]
      %v319 = vld [vmem:[%s207 + $0x2e8] sm:$0xff]
      %v320 = vld [vmem:[%s207 + $0x2f0] sm:$0xff]
      %v321 = vld [vmem:[%s207 + $0x2f8] sm:$0xff]
      %v322 = vld [vmem:[%s207 + $0x300] sm:$0xff]
      %v323 = vld [vmem:[%s207 + $0x308] sm:$0xff]
      %v324 = vld [vmem:[%s207 + $0x310] sm:$0xff]
      %v325 = vld [vmem:[%s207 + $0x318] sm:$0xff]
      %v326 = vld [vmem:[%s207 + $0x320] sm:$0xff]
      %v327 = vld [vmem:[%s207 + $0x328] sm:$0xff]
      %v328 = vld [vmem:[%s207 + $0x330] sm:$0xff]
      %v329 = vld [vmem:[%s207 + $0x338] sm:$0xff]
      %v330 = vld [vmem:[%s207 + $0x340] sm:$0xff]
      %v331 = vld [vmem:[%s207 + $0x348] sm:$0xff]
      %v332 = vld [vmem:[%s207 + $0x350] sm:$0xff]
      %v333 = vld [vmem:[%s207 + $0x358] sm:$0xff]
      %v334 = vld [vmem:[%s207 + $0x360] sm:$0xff]
      %v335 = vld [vmem:[%s207 + $0x368] sm:$0xff]
      %v336 = vld [vmem:[%s207 + $0x370] sm:$0xff]
      %v337 = vld [vmem:[%s207 + $0x378] sm:$0xff]
      %v338 = vld [vmem:[%s207 + $0x380] sm:$0xff]
      %v339 = vld [vmem:[%s207 + $0x388] sm:$0xff]
      %v340 = vld [vmem:[%s207 + $0x390] sm:$0xff]
      %v341 = vld [vmem:[%s207 + $0x398] sm:$0xff]
      %v342 = vld [vmem:[%s207 + $0x3a0] sm:$0xff]
      %v343 = vld [vmem:[%s207 + $0x3a8] sm:$0xff]
      %v344 = vld [vmem:[%s207 + $0x3b0] sm:$0xff]
      %v345 = vld [vmem:[%s207 + $0x3b8] sm:$0xff]
      %v346 = vld [vmem:[%s207 + $0x3c0] sm:$0xff]
      %v347 = vld [vmem:[%s207 + $0x3c8] sm:$0xff]
      %v348 = vld [vmem:[%s207 + $0x3d0] sm:$0xff]
      %v349 = vld [vmem:[%s207 + $0x3d8] sm:$0xff]
      %v350 = vld [vmem:[%s207 + $0x3e0] sm:$0xff]
      %v351 = vld [vmem:[%s207 + $0x3e8] sm:$0xff]
      %v352 = vld [vmem:[%s207 + $0x3f0] sm:$0xff]
      %v353 = vld [vmem:[%s207 + $0x3f8] sm:$0xff]
      %v354 = vld [vmem:[%s207 + $0x400] sm:$0xff]
      %v355 = vld [vmem:[%s207 + $0x408] sm:$0xff]
      %v356 = vld [vmem:[%s207 + $0x410] sm:$0xff]
      %v357 = vld [vmem:[%s207 + $0x418] sm:$0xff]
      %v358 = vld [vmem:[%s207 + $0x420] sm:$0xff]
      %v359 = vld [vmem:[%s207 + $0x428] sm:$0xff]
      %v360 = vld [vmem:[%s207 + $0x430] sm:$0xff]
      %v361 = vld [vmem:[%s207 + $0x438] sm:$0xff]
      %v362 = vld [vmem:[%s207 + $0x440] sm:$0xff]
      %v363 = vld [vmem:[%s207 + $0x448] sm:$0xff]
      %v364 = vld [vmem:[%s207 + $0x450] sm:$0xff]
      %v365 = vld [vmem:[%s207 + $0x458] sm:$0xff]
      %v366 = vld [vmem:[%s207 + $0x460] sm:$0xff]
      %v367 = vld [vmem:[%s207 + $0x468] sm:$0xff]
      %v368 = vld [vmem:[%s207 + $0x470] sm:$0xff]
      %v369 = vld [vmem:[%s207 + $0x478] sm:$0xff]
      %v370 = vld [vmem:[%s207 + $0x480] sm:$0xff]
      %v371 = vld [vmem:[%s207 + $0x488] sm:$0xff]
      %v372 = vld [vmem:[%s207 + $0x490] sm:$0xff]
      %v373 = vld [vmem:[%s207 + $0x498] sm:$0xff]
      %v374 = vld [vmem:[%s207 + $0x4a0] sm:$0xff]
      %v375 = vld [vmem:[%s207 + $0x4a8] sm:$0xff]
      %v376 = vld [vmem:[%s207 + $0x4b0] sm:$0xff]
      %v377 = vld [vmem:[%s207 + $0x4b8] sm:$0xff]
      %v378 = vld [vmem:[%s207 + $0x4c0] sm:$0xff]
      %v379 = vld [vmem:[%s207 + $0x4c8] sm:$0xff]
      %v380 = vld [vmem:[%s207 + $0x4d0] sm:$0xff]
      %v381 = vld [vmem:[%s207 + $0x4d8] sm:$0xff]
      %v382 = vld [vmem:[%s207 + $0x4e0] sm:$0xff]
      %v383 = vld [vmem:[%s207 + $0x4e8] sm:$0xff]
      %v384 = vld [vmem:[%s207 + $0x4f0] sm:$0xff]
      %v385 = vld [vmem:[%s207 + $0x4f8] sm:$0xff]
      %v386 = vld [vmem:[%s207 + $0x500] sm:$0xff]
      %v387 = vld [vmem:[%s207 + $0x508] sm:$0xff]
      %v388 = vld [vmem:[%s207 + $0x510] sm:$0xff]
      %v389 = vld [vmem:[%s207 + $0x518] sm:$0xff]
      %v390 = vld [vmem:[%s207 + $0x520] sm:$0xff]
      %v391 = vld [vmem:[%s207 + $0x528] sm:$0xff]
      %v392 = vld [vmem:[%s207 + $0x530] sm:$0xff]
      %v393 = vld [vmem:[%s207 + $0x538] sm:$0xff]
      %v394 = vld [vmem:[%s207 + $0x540] sm:$0xff]
      %v395 = vld [vmem:[%s207 + $0x548] sm:$0xff]
      %v396 = vld [vmem:[%s207 + $0x550] sm:$0xff]
      %v397 = vld [vmem:[%s207 + $0x558] sm:$0xff]
      %v398 = vld [vmem:[%s207 + $0x560] sm:$0xff]
      %v399 = vld [vmem:[%s207 + $0x568] sm:$0xff]
      %v400 = vld [vmem:[%s207 + $0x570] sm:$0xff]
      %v401 = vld [vmem:[%s207 + $0x578] sm:$0xff]
      %v402 = vld [vmem:[%s207 + $0x580] sm:$0xff]
      %v403 = vld [vmem:[%s207 + $0x588] sm:$0xff]
      %v404 = vld [vmem:[%s207 + $0x590] sm:$0xff]
      %v405 = vld [vmem:[%s207 + $0x598] sm:$0xff]
      %v406 = vld [vmem:[%s207 + $0x5a0] sm:$0xff]
      %v407 = vld [vmem:[%s207 + $0x5a8] sm:$0xff]
      %v408 = vld [vmem:[%s207 + $0x5b0] sm:$0xff]
      %v409 = vld [vmem:[%s207 + $0x5b8] sm:$0xff]
      %v410 = vld [vmem:[%s207 + $0x5c0] sm:$0xff]
      %v411 = vld [vmem:[%s207 + $0x5c8] sm:$0xff]
      %v412 = vld [vmem:[%s207 + $0x5d0] sm:$0xff]
      %v413 = vld [vmem:[%s207 + $0x5d8] sm:$0xff]
      %v414 = vld [vmem:[%s207 + $0x5e0] sm:$0xff]
      %v415 = vld [vmem:[%s207 + $0x5e8] sm:$0xff]
      %v416 = vld [vmem:[%s207 + $0x5f0] sm:$0xff]
      %v417 = vld [vmem:[%s207 + $0x5f8] sm:$0xff]
      %v418 = vld [vmem:[%s207 + $0x600] sm:$0xff]
      %v419 = vld [vmem:[%s207 + $0x608] sm:$0xff]
      %v420 = vld [vmem:[%s207 + $0x610] sm:$0xff]
      %v421 = vld [vmem:[%s207 + $0x618] sm:$0xff]
      %v422 = vld [vmem:[%s207 + $0x620] sm:$0xff]
      %v423 = vld [vmem:[%s207 + $0x628] sm:$0xff]
      %v424 = vld [vmem:[%s207 + $0x630] sm:$0xff]
      %v425 = vld [vmem:[%s207 + $0x638] sm:$0xff]
      %v426 = vld [vmem:[%s207 + $0x640] sm:$0xff]
      %v427 = vld [vmem:[%s207 + $0x648] sm:$0xff]
      %v428 = vld [vmem:[%s207 + $0x650] sm:$0xff]
      %v429 = vld [vmem:[%s207 + $0x658] sm:$0xff]
      %v430 = vld [vmem:[%s207 + $0x660] sm:$0xff]
      %v431 = vld [vmem:[%s207 + $0x668] sm:$0xff]
      %v432 = vld [vmem:[%s207 + $0x670] sm:$0xff]
      %v433 = vld [vmem:[%s207 + $0x678] sm:$0xff]
      %v434 = vld [vmem:[%s207 + $0x680] sm:$0xff]
      %v435 = vld [vmem:[%s207 + $0x688] sm:$0xff]
      %v436 = vld [vmem:[%s207 + $0x690] sm:$0xff]
      %v437 = vld [vmem:[%s207 + $0x698] sm:$0xff]
      %v438 = vld [vmem:[%s207 + $0x6a0] sm:$0xff]
      %v439 = vld [vmem:[%s207 + $0x6a8] sm:$0xff]
      %v440 = vld [vmem:[%s207 + $0x6b0] sm:$0xff]
      %v441 = vld [vmem:[%s207 + $0x6b8] sm:$0xff]
      %v442 = vld [vmem:[%s207 + $0x6c0] sm:$0xff]
      %v443 = vld [vmem:[%s207 + $0x6c8] sm:$0xff]
      %v444 = vld [vmem:[%s207 + $0x6d0] sm:$0xff]
      %v445 = vld [vmem:[%s207 + $0x6d8] sm:$0xff]
      %v446 = vld [vmem:[%s207 + $0x6e0] sm:$0xff]
      %v447 = vld [vmem:[%s207 + $0x6e8] sm:$0xff]
      %v448 = vld [vmem:[%s207 + $0x6f0] sm:$0xff]
      %v449 = vld [vmem:[%s207 + $0x6f8] sm:$0xff]
      %v450 = vld [vmem:[%s207 + $0x700] sm:$0xff]
      %v451 = vld [vmem:[%s207 + $0x708] sm:$0xff]
      %v452 = vld [vmem:[%s207 + $0x710] sm:$0xff]
      %v453 = vld [vmem:[%s207 + $0x718] sm:$0xff]
      %v454 = vld [vmem:[%s207 + $0x720] sm:$0xff]
      %v455 = vld [vmem:[%s207 + $0x728] sm:$0xff]
      %v456 = vld [vmem:[%s207 + $0x730] sm:$0xff]
      %v457 = vld [vmem:[%s207 + $0x738] sm:$0xff]
      %v458 = vld [vmem:[%s207 + $0x740] sm:$0xff]
      %v459 = vld [vmem:[%s207 + $0x748] sm:$0xff]
      %v460 = vld [vmem:[%s207 + $0x750] sm:$0xff]
      %v461 = vld [vmem:[%s207 + $0x758] sm:$0xff]
      %v462 = vld [vmem:[%s207 + $0x760] sm:$0xff]
      %v463 = vld [vmem:[%s207 + $0x768] sm:$0xff]
      %v464 = vld [vmem:[%s207 + $0x770] sm:$0xff]
      %v465 = vld [vmem:[%s207 + $0x778] sm:$0xff]
      %v466 = vld [vmem:[%s212] sm:$0xf]
      %v467 = vld [vmem:[%s212 + $0x4] sm:$0x1]
      %v468 = vpack.c.bf16 %v227, %v226
      %v469 = vpack.c.bf16 %v229, %v228
      %v470 = vpack.c.bf16 %v231, %v230
      %v471 = vpack.c.bf16 %v233, %v232
      %v472 = vpack.c.bf16 %v235, %v234
      %v473 = vpack.c.bf16 %v237, %v236
      %v474 = vpack.c.bf16 %v239, %v238
      %v475 = vpack.c.bf16 %v241, %v240
      %v476 = vpack.c.bf16 %v243, %v242
      %v477 = vpack.c.bf16 %v245, %v244
      %v478 = vpack.c.bf16 %v247, %v246
      %v479 = vpack.c.bf16 %v249, %v248
      %v480 = vpack.c.bf16 %v251, %v250
      %v481 = vpack.c.bf16 %v253, %v252
      %v482 = vpack.c.bf16 %v255, %v254
      %v483 = vpack.c.bf16 %v257, %v256
      %v484 = vpack.c.bf16 %v259, %v258
      %v485 = vpack.c.bf16 %v261, %v260
      %v486 = vpack.c.bf16 %v263, %v262
      %v487 = vpack.c.bf16 %v265, %v264
      %v488 = vpack.c.bf16 %v267, %v266
      %v489 = vpack.c.bf16 %v269, %v268
      %v490 = vpack.c.bf16 %v271, %v270
      %v491 = vpack.c.bf16 %v273, %v272
      %v492 = vpack.c.bf16 %v275, %v274
      %v493 = vpack.c.bf16 %v277, %v276
      %v494 = vpack.c.bf16 %v279, %v278
      %v495 = vpack.c.bf16 %v281, %v280
      %v496 = vpack.c.bf16 %v283, %v282
      %v497 = vpack.c.bf16 %v285, %v284
      %v498 = vpack.c.bf16 %v287, %v286
      %v499 = vpack.c.bf16 %v289, %v288
      %v500 = vpack.c.bf16 %v291, %v290
      %v501 = vpack.c.bf16 %v293, %v292
      %v502 = vpack.c.bf16 %v295, %v294
      %v503 = vpack.c.bf16 %v297, %v296
      %v504 = vpack.c.bf16 %v299, %v298
      %v505 = vpack.c.bf16 %v301, %v300
      %v506 = vpack.c.bf16 %v303, %v302
      %v507 = vpack.c.bf16 %v305, %v304
      %v508 = vpack.c.bf16 %v307, %v306
      %v509 = vpack.c.bf16 %v309, %v308
      %v510 = vpack.c.bf16 %v311, %v310
      %v511 = vpack.c.bf16 %v313, %v312
      %v512 = vpack.c.bf16 %v315, %v314
      %v513 = vpack.c.bf16 %v317, %v316
      %v514 = vpack.c.bf16 %v319, %v318
      %v515 = vpack.c.bf16 %v321, %v320
      %v516 = vpack.c.bf16 %v323, %v322
      %v517 = vpack.c.bf16 %v325, %v324
      %v518 = vpack.c.bf16 %v327, %v326
      %v519 = vpack.c.bf16 %v329, %v328
      %v520 = vpack.c.bf16 %v331, %v330
      %v521 = vpack.c.bf16 %v333, %v332
      %v522 = vpack.c.bf16 %v335, %v334
      %v523 = vpack.c.bf16 %v337, %v336
      %v524 = vpack.c.bf16 %v339, %v338
      %v525 = vpack.c.bf16 %v341, %v340
      %v526 = vpack.c.bf16 %v343, %v342
      %v527 = vpack.c.bf16 %v345, %v344
      %v528 = vpack.c.bf16 %v347, %v346
      %v529 = vpack.c.bf16 %v349, %v348
      %v530 = vpack.c.bf16 %v351, %v350
      %v531 = vpack.c.bf16 %v353, %v352
      %v532 = vpack.c.bf16 %v355, %v354
      %v533 = vpack.c.bf16 %v357, %v356
      %v534 = vpack.c.bf16 %v359, %v358
      %v535 = vpack.c.bf16 %v361, %v360
      %v536 = vpack.c.bf16 %v363, %v362
      %v537 = vpack.c.bf16 %v365, %v364
      %v538 = vpack.c.bf16 %v367, %v366
      %v539 = vpack.c.bf16 %v369, %v368
      %v540 = vpack.c.bf16 %v371, %v370
      %v541 = vpack.c.bf16 %v373, %v372
      %v542 = vpack.c.bf16 %v375, %v374
      %v543 = vpack.c.bf16 %v377, %v376
      %v544 = vpack.c.bf16 %v379, %v378
      %v545 = vpack.c.bf16 %v381, %v380
      %v546 = vpack.c.bf16 %v383, %v382
      %v547 = vpack.c.bf16 %v385, %v384
      %v548 = vpack.c.bf16 %v387, %v386
      %v549 = vpack.c.bf16 %v389, %v388
      %v550 = vpack.c.bf16 %v391, %v390
      %v551 = vpack.c.bf16 %v393, %v392
      %v552 = vpack.c.bf16 %v395, %v394
      %v553 = vpack.c.bf16 %v397, %v396
      %v554 = vpack.c.bf16 %v399, %v398
      %v555 = vpack.c.bf16 %v401, %v400
      %v556 = vpack.c.bf16 %v403, %v402
      %v557 = vpack.c.bf16 %v405, %v404
      %v558 = vpack.c.bf16 %v407, %v406
      %v559 = vpack.c.bf16 %v409, %v408
      %v560 = vpack.c.bf16 %v411, %v410
      %v561 = vpack.c.bf16 %v413, %v412
      %v562 = vpack.c.bf16 %v415, %v414
      %v563 = vpack.c.bf16 %v417, %v416
      %v564 = vpack.c.bf16 %v419, %v418
      %v565 = vpack.c.bf16 %v421, %v420
      %v566 = vpack.c.bf16 %v423, %v422
      %v567 = vpack.c.bf16 %v425, %v424
      %v568 = vpack.c.bf16 %v427, %v426
      %v569 = vpack.c.bf16 %v429, %v428
      %v570 = vpack.c.bf16 %v431, %v430
      %v571 = vpack.c.bf16 %v433, %v432
      %v572 = vpack.c.bf16 %v435, %v434
      %v573 = vpack.c.bf16 %v437, %v436
      %v574 = vpack.c.bf16 %v439, %v438
      %v575 = vpack.c.bf16 %v441, %v440
      %v576 = vpack.c.bf16 %v443, %v442
      %v577 = vpack.c.bf16 %v445, %v444
      %v578 = vpack.c.bf16 %v447, %v446
      %v579 = vpack.c.bf16 %v449, %v448
      %v580 = vpack.c.bf16 %v451, %v450
      %v581 = vpack.c.bf16 %v453, %v452
      %v582 = vpack.c.bf16 %v455, %v454
      %v583 = vpack.c.bf16 %v457, %v456
      %v584 = vpack.c.bf16 %v459, %v458
      %v585 = vpack.c.bf16 %v461, %v460
      %v586 = vpack.c.bf16 %v463, %v462
      %v587 = vpack.c.bf16 %v465, %v464
      %v588 = vld [vmem:[%s215] sm:$0x1]
      %v590 = vperm.slane %v588, 0
      %v594 = vunpack.c.l.b16 %v466
      %v595 = vunpack.c.l.b16 %v467
      %v596 = vpack.c.b16 %v595, %v594
      %vm597 = vcmask 72704
      %v599 = vsel %vm597, %v468, 0
      %v602 = vsel %vm597, %v469, 0
      %v605 = vsel %vm597, %v470, 0
      %v608 = vsel %vm597, %v471, 0
      %v611 = vsel %vm597, %v472, 0
      %v614 = vsel %vm597, %v473, 0
      %v617 = vsel %vm597, %v474, 0
      %v620 = vsel %vm597, %v475, 0
      %v623 = vsel %vm597, %v476, 0
      %v626 = vsel %vm597, %v477, 0
      %v629 = vsel %vm597, %v478, 0
      %v632 = vsel %vm597, %v479, 0
      %v635 = vsel %vm597, %v480, 0
      %v638 = vsel %vm597, %v481, 0
      %v641 = vsel %vm597, %v482, 0
      %v644 = vsel %vm597, %v483, 0
      %v647 = vsel %vm597, %v484, 0
      %v650 = vsel %vm597, %v485, 0
      %v653 = vsel %vm597, %v486, 0
      %v656 = vsel %vm597, %v487, 0
      %v659 = vsel %vm597, %v488, 0
      %v662 = vsel %vm597, %v489, 0
      %v665 = vsel %vm597, %v490, 0
      %v668 = vsel %vm597, %v491, 0
      %v671 = vsel %vm597, %v492, 0
      %v674 = vsel %vm597, %v493, 0
      %v677 = vsel %vm597, %v494, 0
      %v680 = vsel %vm597, %v495, 0
      %v683 = vsel %vm597, %v496, 0
      %v686 = vsel %vm597, %v497, 0
      %v689 = vsel %vm597, %v498, 0
      %v692 = vsel %vm597, %v499, 0
      %v695 = vsel %vm597, %v500, 0
      %v698 = vsel %vm597, %v501, 0
      %v701 = vsel %vm597, %v502, 0
      %v704 = vsel %vm597, %v503, 0
      %v707 = vsel %vm597, %v504, 0
      %v710 = vsel %vm597, %v505, 0
      %v713 = vsel %vm597, %v506, 0
      %v716 = vsel %vm597, %v507, 0
      %v719 = vsel %vm597, %v508, 0
      %v722 = vsel %vm597, %v509, 0
      %v725 = vsel %vm597, %v510, 0
      %v728 = vsel %vm597, %v511, 0
      %v731 = vsel %vm597, %v512, 0
      %v734 = vsel %vm597, %v513, 0
      %v737 = vsel %vm597, %v514, 0
      %v740 = vsel %vm597, %v515, 0
      %v743 = vsel %vm597, %v516, 0
      %v746 = vsel %vm597, %v517, 0
      %v749 = vsel %vm597, %v518, 0
      %v752 = vsel %vm597, %v519, 0
      %v755 = vsel %vm597, %v520, 0
      %v758 = vsel %vm597, %v521, 0
      %v761 = vsel %vm597, %v522, 0
      %v764 = vsel %vm597, %v523, 0
      %v767 = vsel %vm597, %v524, 0
      %v770 = vsel %vm597, %v525, 0
      %v773 = vsel %vm597, %v526, 0
      %v776 = vsel %vm597, %v527, 0
      %v779 = vsel %vm597, %v528, 0
      %v782 = vsel %vm597, %v529, 0
      %v785 = vsel %vm597, %v530, 0
      %v788 = vsel %vm597, %v531, 0
      %v791 = vsel %vm597, %v532, 0
      %v794 = vsel %vm597, %v533, 0
      %v797 = vsel %vm597, %v534, 0
      %v800 = vsel %vm597, %v535, 0
      %v803 = vsel %vm597, %v536, 0
      %v806 = vsel %vm597, %v537, 0
      %v809 = vsel %vm597, %v538, 0
      %v812 = vsel %vm597, %v539, 0
      %v815 = vsel %vm597, %v540, 0
      %v818 = vsel %vm597, %v541, 0
      %v821 = vsel %vm597, %v542, 0
      %v824 = vsel %vm597, %v543, 0
      %v827 = vsel %vm597, %v544, 0
      %v830 = vsel %vm597, %v545, 0
      %v833 = vsel %vm597, %v546, 0
      %v836 = vsel %vm597, %v547, 0
      %v839 = vsel %vm597, %v548, 0
      %v842 = vsel %vm597, %v549, 0
      %v845 = vsel %vm597, %v550, 0
      %v848 = vsel %vm597, %v551, 0
      %v851 = vsel %vm597, %v552, 0
      %v854 = vsel %vm597, %v553, 0
      %v857 = vsel %vm597, %v554, 0
      %v860 = vsel %vm597, %v555, 0
      %v863 = vsel %vm597, %v556, 0
      %v866 = vsel %vm597, %v557, 0
      %v869 = vsel %vm597, %v558, 0
      %v872 = vsel %vm597, %v559, 0
      %v875 = vsel %vm597, %v560, 0
      %v878 = vsel %vm597, %v561, 0
      %v881 = vsel %vm597, %v562, 0
      %v884 = vsel %vm597, %v563, 0
      %v887 = vsel %vm597, %v564, 0
      %v890 = vsel %vm597, %v565, 0
      %v893 = vsel %vm597, %v566, 0
      %v896 = vsel %vm597, %v567, 0
      %v899 = vsel %vm597, %v568, 0
      %v902 = vsel %vm597, %v569, 0
      %v905 = vsel %vm597, %v570, 0
      %v908 = vsel %vm597, %v571, 0
      %v911 = vsel %vm597, %v572, 0
      %v914 = vsel %vm597, %v573, 0
      %v917 = vsel %vm597, %v574, 0
      %v920 = vsel %vm597, %v575, 0
      %v923 = vsel %vm597, %v576, 0
      %v926 = vsel %vm597, %v577, 0
      %v929 = vsel %vm597, %v578, 0
      %v932 = vsel %vm597, %v579, 0
      %v935 = vsel %vm597, %v580, 0
      %v938 = vsel %vm597, %v581, 0
      %v941 = vsel %vm597, %v582, 0
      %v944 = vsel %vm597, %v583, 0
      %v947 = vsel %vm597, %v584, 0
      %v950 = vsel %vm597, %v585, 0
      %v953 = vsel %vm597, %v586, 0
      %v956 = vsel %vm597, %v587, 0
      %vm958 = vcmask 1043456
      %vm959 = vcmask 1044480
      %v960 = vsel %vm958, 4294967295, 65535
      %v961 = vsel %vm959, %v960, 0
      %v963 = vand.u32 %v596, %v961
      %965 = vmatpush.bf16.msra.mxu0 0
      %966 = vmatpush.bf16.msra.mxu0 0
      %967 = vmatpush.bf16.msra.mxu0 0
      %968 = vmatpush.bf16.msra.mxu0 0
      %969 = vmatpush.bf16.msra.mxu0 0
      %970 = vmatpush.bf16.msra.mxu0 0
      %971 = vmatpush.bf16.msra.mxu0 0
      %972 = vmatpush.bf16.msra.mxu0 %v963
      %973 = vmatmul.bf16.gmra.mxu0 %v599
      %v974 = vpop.f32.mrf.mxu0
      %v975 = vadd.f32 %v590, %v974
      %v976 = vpop.f32.mrf.mxu0
      %v977 = vadd.f32 %v590, %v976
      %978 = vmatmul.bf16.gmra.mxu0 %v602
      %v979 = vpop.f32.mrf.mxu0
      %v980 = vadd.f32 %v590, %v979
      %v981 = vpop.f32.mrf.mxu0
      %v982 = vadd.f32 %v590, %v981
      %983 = vmatmul.bf16.gmra.mxu0 %v605
      %v984 = vpop.f32.mrf.mxu0
      %v985 = vadd.f32 %v590, %v984
      %v986 = vpop.f32.mrf.mxu0
      %v987 = vadd.f32 %v590, %v986
      %988 = vmatmul.bf16.gmra.mxu0 %v608
      %v989 = vpop.f32.mrf.mxu0
      %v990 = vadd.f32 %v590, %v989
      %v991 = vpop.f32.mrf.mxu0
      %v992 = vadd.f32 %v590, %v991
      %993 = vmatmul.bf16.gmra.mxu0 %v611
      %v994 = vpop.f32.mrf.mxu0
      %v995 = vadd.f32 %v590, %v994
      %v996 = vpop.f32.mrf.mxu0
      %v997 = vadd.f32 %v590, %v996
      %998 = vmatmul.bf16.gmra.mxu0 %v614
      %v999 = vpop.f32.mrf.mxu0
      %v1000 = vadd.f32 %v590, %v999
      %v1001 = vpop.f32.mrf.mxu0
      %v1002 = vadd.f32 %v590, %v1001
      %1003 = vmatmul.bf16.gmra.mxu0 %v617
      %v1004 = vpop.f32.mrf.mxu0
      %v1005 = vadd.f32 %v590, %v1004
      %v1006 = vpop.f32.mrf.mxu0
      %v1007 = vadd.f32 %v590, %v1006
      %1008 = vmatmul.bf16.gmra.mxu0 %v620
      %v1009 = vpop.f32.mrf.mxu0
      %v1010 = vadd.f32 %v590, %v1009
      %v1011 = vpop.f32.mrf.mxu0
      %v1012 = vadd.f32 %v590, %v1011
      %1013 = vmatmul.bf16.gmra.mxu0 %v623
      %v1014 = vpop.f32.mrf.mxu0
      %v1015 = vadd.f32 %v590, %v1014
      %v1016 = vpop.f32.mrf.mxu0
      %v1017 = vadd.f32 %v590, %v1016
      %1018 = vmatmul.bf16.gmra.mxu0 %v626
      %v1019 = vpop.f32.mrf.mxu0
      %v1020 = vadd.f32 %v590, %v1019
      %v1021 = vpop.f32.mrf.mxu0
      %v1022 = vadd.f32 %v590, %v1021
      %1023 = vmatmul.bf16.gmra.mxu0 %v629
      %v1024 = vpop.f32.mrf.mxu0
      %v1025 = vadd.f32 %v590, %v1024
      %v1026 = vpop.f32.mrf.mxu0
      %v1027 = vadd.f32 %v590, %v1026
      %1028 = vmatmul.bf16.gmra.mxu0 %v632
      %v1029 = vpop.f32.mrf.mxu0
      %v1030 = vadd.f32 %v590, %v1029
      %v1031 = vpop.f32.mrf.mxu0
      %v1032 = vadd.f32 %v590, %v1031
      %1033 = vmatmul.bf16.gmra.mxu0 %v635
      %v1034 = vpop.f32.mrf.mxu0
      %v1035 = vadd.f32 %v590, %v1034
      %v1036 = vpop.f32.mrf.mxu0
      %v1037 = vadd.f32 %v590, %v1036
      %1038 = vmatmul.bf16.gmra.mxu0 %v638
      %v1039 = vpop.f32.mrf.mxu0
      %v1040 = vadd.f32 %v590, %v1039
      %v1041 = vpop.f32.mrf.mxu0
      %v1042 = vadd.f32 %v590, %v1041
      %1043 = vmatmul.bf16.gmra.mxu0 %v641
      %v1044 = vpop.f32.mrf.mxu0
      %v1045 = vadd.f32 %v590, %v1044
      %v1046 = vpop.f32.mrf.mxu0
      %v1047 = vadd.f32 %v590, %v1046
      %1048 = vmatmul.bf16.gmra.mxu0 %v644
      %v1049 = vpop.f32.mrf.mxu0
      %v1050 = vadd.f32 %v590, %v1049
      %v1051 = vpop.f32.mrf.mxu0
      %v1052 = vadd.f32 %v590, %v1051
      %1053 = vmatmul.bf16.gmra.mxu0 %v647
      %v1054 = vpop.f32.mrf.mxu0
      %v1055 = vadd.f32 %v590, %v1054
      %v1056 = vpop.f32.mrf.mxu0
      %v1057 = vadd.f32 %v590, %v1056
      %1058 = vmatmul.bf16.gmra.mxu0 %v650
      %v1059 = vpop.f32.mrf.mxu0
      %v1060 = vadd.f32 %v590, %v1059
      %v1061 = vpop.f32.mrf.mxu0
      %v1062 = vadd.f32 %v590, %v1061
      %1063 = vmatmul.bf16.gmra.mxu0 %v653
      %v1064 = vpop.f32.mrf.mxu0
      %v1065 = vadd.f32 %v590, %v1064
      %v1066 = vpop.f32.mrf.mxu0
      %v1067 = vadd.f32 %v590, %v1066
      %1068 = vmatmul.bf16.gmra.mxu0 %v656
      %v1069 = vpop.f32.mrf.mxu0
      %v1070 = vadd.f32 %v590, %v1069
      %v1071 = vpop.f32.mrf.mxu0
      %v1072 = vadd.f32 %v590, %v1071
      %1073 = vmatmul.bf16.gmra.mxu0 %v659
      %v1074 = vpop.f32.mrf.mxu0
      %v1075 = vadd.f32 %v590, %v1074
      %v1076 = vpop.f32.mrf.mxu0
      %v1077 = vadd.f32 %v590, %v1076
      %1078 = vmatmul.bf16.gmra.mxu0 %v662
      %v1079 = vpop.f32.mrf.mxu0
      %v1080 = vadd.f32 %v590, %v1079
      %v1081 = vpop.f32.mrf.mxu0
      %v1082 = vadd.f32 %v590, %v1081
      %1083 = vmatmul.bf16.gmra.mxu0 %v665
      %v1084 = vpop.f32.mrf.mxu0
      %v1085 = vadd.f32 %v590, %v1084
      %v1086 = vpop.f32.mrf.mxu0
      %v1087 = vadd.f32 %v590, %v1086
      %1088 = vmatmul.bf16.gmra.mxu0 %v668
      %v1089 = vpop.f32.mrf.mxu0
      %v1090 = vadd.f32 %v590, %v1089
      %v1091 = vpop.f32.mrf.mxu0
      %v1092 = vadd.f32 %v590, %v1091
      %1093 = vmatmul.bf16.gmra.mxu0 %v671
      %v1094 = vpop.f32.mrf.mxu0
      %v1095 = vadd.f32 %v590, %v1094
      %v1096 = vpop.f32.mrf.mxu0
      %v1097 = vadd.f32 %v590, %v1096
      %1098 = vmatmul.bf16.gmra.mxu0 %v674
      %v1099 = vpop.f32.mrf.mxu0
      %v1100 = vadd.f32 %v590, %v1099
      %v1101 = vpop.f32.mrf.mxu0
      %v1102 = vadd.f32 %v590, %v1101
      %1103 = vmatmul.bf16.gmra.mxu0 %v677
      %v1104 = vpop.f32.mrf.mxu0
      %v1105 = vadd.f32 %v590, %v1104
      %v1106 = vpop.f32.mrf.mxu0
      %v1107 = vadd.f32 %v590, %v1106
      %1108 = vmatmul.bf16.gmra.mxu0 %v680
      %v1109 = vpop.f32.mrf.mxu0
      %v1110 = vadd.f32 %v590, %v1109
      %v1111 = vpop.f32.mrf.mxu0
      %v1112 = vadd.f32 %v590, %v1111
      %1113 = vmatmul.bf16.gmra.mxu0 %v683
      %v1114 = vpop.f32.mrf.mxu0
      %v1115 = vadd.f32 %v590, %v1114
      %v1116 = vpop.f32.mrf.mxu0
      %v1117 = vadd.f32 %v590, %v1116
      %1118 = vmatmul.bf16.gmra.mxu0 %v686
      %v1119 = vpop.f32.mrf.mxu0
      %v1120 = vadd.f32 %v590, %v1119
      %v1121 = vpop.f32.mrf.mxu0
      %v1122 = vadd.f32 %v590, %v1121
      %1123 = vmatmul.bf16.gmra.mxu0 %v689
      %v1124 = vpop.f32.mrf.mxu0
      %v1125 = vadd.f32 %v590, %v1124
      %v1126 = vpop.f32.mrf.mxu0
      %v1127 = vadd.f32 %v590, %v1126
      %1128 = vmatmul.bf16.gmra.mxu0 %v692
      %v1129 = vpop.f32.mrf.mxu0
      %v1130 = vadd.f32 %v590, %v1129
      %v1131 = vpop.f32.mrf.mxu0
      %v1132 = vadd.f32 %v590, %v1131
      %1133 = vmatmul.bf16.gmra.mxu0 %v695
      %v1134 = vpop.f32.mrf.mxu0
      %v1135 = vadd.f32 %v590, %v1134
      %v1136 = vpop.f32.mrf.mxu0
      %v1137 = vadd.f32 %v590, %v1136
      %1138 = vmatmul.bf16.gmra.mxu0 %v698
      %v1139 = vpop.f32.mrf.mxu0
      %v1140 = vadd.f32 %v590, %v1139
      %v1141 = vpop.f32.mrf.mxu0
      %v1142 = vadd.f32 %v590, %v1141
      %1143 = vmatmul.bf16.gmra.mxu0 %v701
      %v1144 = vpop.f32.mrf.mxu0
      %v1145 = vadd.f32 %v590, %v1144
      %v1146 = vpop.f32.mrf.mxu0
      %v1147 = vadd.f32 %v590, %v1146
      %1148 = vmatmul.bf16.gmra.mxu0 %v704
      %v1149 = vpop.f32.mrf.mxu0
      %v1150 = vadd.f32 %v590, %v1149
      %v1151 = vpop.f32.mrf.mxu0
      %v1152 = vadd.f32 %v590, %v1151
      %1153 = vmatmul.bf16.gmra.mxu0 %v707
      %v1154 = vpop.f32.mrf.mxu0
      %v1155 = vadd.f32 %v590, %v1154
      %v1156 = vpop.f32.mrf.mxu0
      %v1157 = vadd.f32 %v590, %v1156
      %1158 = vmatmul.bf16.gmra.mxu0 %v710
      %v1159 = vpop.f32.mrf.mxu0
      %v1160 = vadd.f32 %v590, %v1159
      %v1161 = vpop.f32.mrf.mxu0
      %v1162 = vadd.f32 %v590, %v1161
      %1163 = vmatmul.bf16.gmra.mxu0 %v713
      %v1164 = vpop.f32.mrf.mxu0
      %v1165 = vadd.f32 %v590, %v1164
      %v1166 = vpop.f32.mrf.mxu0
      %v1167 = vadd.f32 %v590, %v1166
      %1168 = vmatmul.bf16.gmra.mxu0 %v716
      %v1169 = vpop.f32.mrf.mxu0
      %v1170 = vadd.f32 %v590, %v1169
      %v1171 = vpop.f32.mrf.mxu0
      %v1172 = vadd.f32 %v590, %v1171
      %1173 = vmatmul.bf16.gmra.mxu0 %v719
      %v1174 = vpop.f32.mrf.mxu0
      %v1175 = vadd.f32 %v590, %v1174
      %v1176 = vpop.f32.mrf.mxu0
      %v1177 = vadd.f32 %v590, %v1176
      %1178 = vmatmul.bf16.gmra.mxu0 %v722
      %v1179 = vpop.f32.mrf.mxu0
      %v1180 = vadd.f32 %v590, %v1179
      %v1181 = vpop.f32.mrf.mxu0
      %v1182 = vadd.f32 %v590, %v1181
      %1183 = vmatmul.bf16.gmra.mxu0 %v725
      %v1184 = vpop.f32.mrf.mxu0
      %v1185 = vadd.f32 %v590, %v1184
      %v1186 = vpop.f32.mrf.mxu0
      %v1187 = vadd.f32 %v590, %v1186
      %1188 = vmatmul.bf16.gmra.mxu0 %v728
      %v1189 = vpop.f32.mrf.mxu0
      %v1190 = vadd.f32 %v590, %v1189
      %v1191 = vpop.f32.mrf.mxu0
      %v1192 = vadd.f32 %v590, %v1191
      %1193 = vmatmul.bf16.gmra.mxu0 %v731
      %v1194 = vpop.f32.mrf.mxu0
      %v1195 = vadd.f32 %v590, %v1194
      %v1196 = vpop.f32.mrf.mxu0
      %v1197 = vadd.f32 %v590, %v1196
      %1198 = vmatmul.bf16.gmra.mxu0 %v734
      %v1199 = vpop.f32.mrf.mxu0
      %v1200 = vadd.f32 %v590, %v1199
      %v1201 = vpop.f32.mrf.mxu0
      %v1202 = vadd.f32 %v590, %v1201
      %1203 = vmatmul.bf16.gmra.mxu0 %v737
      %v1204 = vpop.f32.mrf.mxu0
      %v1205 = vadd.f32 %v590, %v1204
      %v1206 = vpop.f32.mrf.mxu0
      %v1207 = vadd.f32 %v590, %v1206
      %1208 = vmatmul.bf16.gmra.mxu0 %v740
      %v1209 = vpop.f32.mrf.mxu0
      %v1210 = vadd.f32 %v590, %v1209
      %v1211 = vpop.f32.mrf.mxu0
      %v1212 = vadd.f32 %v590, %v1211
      %1213 = vmatmul.bf16.gmra.mxu0 %v743
      %v1214 = vpop.f32.mrf.mxu0
      %v1215 = vadd.f32 %v590, %v1214
      %v1216 = vpop.f32.mrf.mxu0
      %v1217 = vadd.f32 %v590, %v1216
      %1218 = vmatmul.bf16.gmra.mxu0 %v746
      %v1219 = vpop.f32.mrf.mxu0
      %v1220 = vadd.f32 %v590, %v1219
      %v1221 = vpop.f32.mrf.mxu0
      %v1222 = vadd.f32 %v590, %v1221
      %1223 = vmatmul.bf16.gmra.mxu0 %v749
      %v1224 = vpop.f32.mrf.mxu0
      %v1225 = vadd.f32 %v590, %v1224
      %v1226 = vpop.f32.mrf.mxu0
      %v1227 = vadd.f32 %v590, %v1226
      %1228 = vmatmul.bf16.gmra.mxu0 %v752
      %v1229 = vpop.f32.mrf.mxu0
      %v1230 = vadd.f32 %v590, %v1229
      %v1231 = vpop.f32.mrf.mxu0
      %v1232 = vadd.f32 %v590, %v1231
      %1233 = vmatmul.bf16.gmra.mxu0 %v755
      %v1234 = vpop.f32.mrf.mxu0
      %v1235 = vadd.f32 %v590, %v1234
      %v1236 = vpop.f32.mrf.mxu0
      %v1237 = vadd.f32 %v590, %v1236
      %1238 = vmatmul.bf16.gmra.mxu0 %v758
      %v1239 = vpop.f32.mrf.mxu0
      %v1240 = vadd.f32 %v590, %v1239
      %v1241 = vpop.f32.mrf.mxu0
      %v1242 = vadd.f32 %v590, %v1241
      %1243 = vmatmul.bf16.gmra.mxu0 %v761
      %v1244 = vpop.f32.mrf.mxu0
      %v1245 = vadd.f32 %v590, %v1244
      %v1246 = vpop.f32.mrf.mxu0
      %v1247 = vadd.f32 %v590, %v1246
      %1248 = vmatmul.bf16.gmra.mxu0 %v764
      %v1249 = vpop.f32.mrf.mxu0
      %v1250 = vadd.f32 %v590, %v1249
      %v1251 = vpop.f32.mrf.mxu0
      %v1252 = vadd.f32 %v590, %v1251
      %1253 = vmatmul.bf16.gmra.mxu0 %v767
      %v1254 = vpop.f32.mrf.mxu0
      %v1255 = vadd.f32 %v590, %v1254
      %v1256 = vpop.f32.mrf.mxu0
      %v1257 = vadd.f32 %v590, %v1256
      %1258 = vmatmul.bf16.gmra.mxu0 %v770
      %v1259 = vpop.f32.mrf.mxu0
      %v1260 = vadd.f32 %v590, %v1259
      %v1261 = vpop.f32.mrf.mxu0
      %v1262 = vadd.f32 %v590, %v1261
      %1263 = vmatmul.bf16.gmra.mxu0 %v773
      %v1264 = vpop.f32.mrf.mxu0
      %v1265 = vadd.f32 %v590, %v1264
      %v1266 = vpop.f32.mrf.mxu0
      %v1267 = vadd.f32 %v590, %v1266
      %1268 = vmatmul.bf16.gmra.mxu0 %v776
      %v1269 = vpop.f32.mrf.mxu0
      %v1270 = vadd.f32 %v590, %v1269
      %v1271 = vpop.f32.mrf.mxu0
      %v1272 = vadd.f32 %v590, %v1271
      %1273 = vmatmul.bf16.gmra.mxu0 %v779
      %v1274 = vpop.f32.mrf.mxu0
      %v1275 = vadd.f32 %v590, %v1274
      %v1276 = vpop.f32.mrf.mxu0
      %v1277 = vadd.f32 %v590, %v1276
      %1278 = vmatmul.bf16.gmra.mxu0 %v782
      %v1279 = vpop.f32.mrf.mxu0
      %v1280 = vadd.f32 %v590, %v1279
      %v1281 = vpop.f32.mrf.mxu0
      %v1282 = vadd.f32 %v590, %v1281
      %1283 = vmatmul.bf16.gmra.mxu0 %v785
      %v1284 = vpop.f32.mrf.mxu0
      %v1285 = vadd.f32 %v590, %v1284
      %v1286 = vpop.f32.mrf.mxu0
      %v1287 = vadd.f32 %v590, %v1286
      %1288 = vmatmul.bf16.gmra.mxu0 %v788
      %v1289 = vpop.f32.mrf.mxu0
      %v1290 = vadd.f32 %v590, %v1289
      %v1291 = vpop.f32.mrf.mxu0
      %v1292 = vadd.f32 %v590, %v1291
      %1293 = vmatmul.bf16.gmra.mxu0 %v791
      %v1294 = vpop.f32.mrf.mxu0
      %v1295 = vadd.f32 %v590, %v1294
      %v1296 = vpop.f32.mrf.mxu0
      %v1297 = vadd.f32 %v590, %v1296
      %1298 = vmatmul.bf16.gmra.mxu0 %v794
      %v1299 = vpop.f32.mrf.mxu0
      %v1300 = vadd.f32 %v590, %v1299
      %v1301 = vpop.f32.mrf.mxu0
      %v1302 = vadd.f32 %v590, %v1301
      %1303 = vmatmul.bf16.gmra.mxu0 %v797
      %v1304 = vpop.f32.mrf.mxu0
      %v1305 = vadd.f32 %v590, %v1304
      %v1306 = vpop.f32.mrf.mxu0
      %v1307 = vadd.f32 %v590, %v1306
      %1308 = vmatmul.bf16.gmra.mxu0 %v800
      %v1309 = vpop.f32.mrf.mxu0
      %v1310 = vadd.f32 %v590, %v1309
      %v1311 = vpop.f32.mrf.mxu0
      %v1312 = vadd.f32 %v590, %v1311
      %1313 = vmatmul.bf16.gmra.mxu0 %v803
      %v1314 = vpop.f32.mrf.mxu0
      %v1315 = vadd.f32 %v590, %v1314
      %v1316 = vpop.f32.mrf.mxu0
      %v1317 = vadd.f32 %v590, %v1316
      %1318 = vmatmul.bf16.gmra.mxu0 %v806
      %v1319 = vpop.f32.mrf.mxu0
      %v1320 = vadd.f32 %v590, %v1319
      %v1321 = vpop.f32.mrf.mxu0
      %v1322 = vadd.f32 %v590, %v1321
      %1323 = vmatmul.bf16.gmra.mxu0 %v809
      %v1324 = vpop.f32.mrf.mxu0
      %v1325 = vadd.f32 %v590, %v1324
      %v1326 = vpop.f32.mrf.mxu0
      %v1327 = vadd.f32 %v590, %v1326
      %1328 = vmatmul.bf16.gmra.mxu0 %v812
      %v1329 = vpop.f32.mrf.mxu0
      %v1330 = vadd.f32 %v590, %v1329
      %v1331 = vpop.f32.mrf.mxu0
      %v1332 = vadd.f32 %v590, %v1331
      %1333 = vmatmul.bf16.gmra.mxu0 %v815
      %v1334 = vpop.f32.mrf.mxu0
      %v1335 = vadd.f32 %v590, %v1334
      %v1336 = vpop.f32.mrf.mxu0
      %v1337 = vadd.f32 %v590, %v1336
      %1338 = vmatmul.bf16.gmra.mxu0 %v818
      %v1339 = vpop.f32.mrf.mxu0
      %v1340 = vadd.f32 %v590, %v1339
      %v1341 = vpop.f32.mrf.mxu0
      %v1342 = vadd.f32 %v590, %v1341
      %1343 = vmatmul.bf16.gmra.mxu0 %v821
      %v1344 = vpop.f32.mrf.mxu0
      %v1345 = vadd.f32 %v590, %v1344
      %v1346 = vpop.f32.mrf.mxu0
      %v1347 = vadd.f32 %v590, %v1346
      %1348 = vmatmul.bf16.gmra.mxu0 %v824
      %v1349 = vpop.f32.mrf.mxu0
      %v1350 = vadd.f32 %v590, %v1349
      %v1351 = vpop.f32.mrf.mxu0
      %v1352 = vadd.f32 %v590, %v1351
      %1353 = vmatmul.bf16.gmra.mxu0 %v827
      %v1354 = vpop.f32.mrf.mxu0
      %v1355 = vadd.f32 %v590, %v1354
      %v1356 = vpop.f32.mrf.mxu0
      %v1357 = vadd.f32 %v590, %v1356
      %1358 = vmatmul.bf16.gmra.mxu0 %v830
      %v1359 = vpop.f32.mrf.mxu0
      %v1360 = vadd.f32 %v590, %v1359
      %v1361 = vpop.f32.mrf.mxu0
      %v1362 = vadd.f32 %v590, %v1361
      %1363 = vmatmul.bf16.gmra.mxu0 %v833
      %v1364 = vpop.f32.mrf.mxu0
      %v1365 = vadd.f32 %v590, %v1364
      %v1366 = vpop.f32.mrf.mxu0
      %v1367 = vadd.f32 %v590, %v1366
      %1368 = vmatmul.bf16.gmra.mxu0 %v836
      %v1369 = vpop.f32.mrf.mxu0
      %v1370 = vadd.f32 %v590, %v1369
      %v1371 = vpop.f32.mrf.mxu0
      %v1372 = vadd.f32 %v590, %v1371
      %1373 = vmatmul.bf16.gmra.mxu0 %v839
      %v1374 = vpop.f32.mrf.mxu0
      %v1375 = vadd.f32 %v590, %v1374
      %v1376 = vpop.f32.mrf.mxu0
      %v1377 = vadd.f32 %v590, %v1376
      %1378 = vmatmul.bf16.gmra.mxu0 %v842
      %v1379 = vpop.f32.mrf.mxu0
      %v1380 = vadd.f32 %v590, %v1379
      %v1381 = vpop.f32.mrf.mxu0
      %v1382 = vadd.f32 %v590, %v1381
      %1383 = vmatmul.bf16.gmra.mxu0 %v845
      %v1384 = vpop.f32.mrf.mxu0
      %v1385 = vadd.f32 %v590, %v1384
      %v1386 = vpop.f32.mrf.mxu0
      %v1387 = vadd.f32 %v590, %v1386
      %1388 = vmatmul.bf16.gmra.mxu0 %v848
      %v1389 = vpop.f32.mrf.mxu0
      %v1390 = vadd.f32 %v590, %v1389
      %v1391 = vpop.f32.mrf.mxu0
      %v1392 = vadd.f32 %v590, %v1391
      %1393 = vmatmul.bf16.gmra.mxu0 %v851
      %v1394 = vpop.f32.mrf.mxu0
      %v1395 = vadd.f32 %v590, %v1394
      %v1396 = vpop.f32.mrf.mxu0
      %v1397 = vadd.f32 %v590, %v1396
      %1398 = vmatmul.bf16.gmra.mxu0 %v854
      %v1399 = vpop.f32.mrf.mxu0
      %v1400 = vadd.f32 %v590, %v1399
      %v1401 = vpop.f32.mrf.mxu0
      %v1402 = vadd.f32 %v590, %v1401
      %1403 = vmatmul.bf16.gmra.mxu0 %v857
      %v1404 = vpop.f32.mrf.mxu0
      %v1405 = vadd.f32 %v590, %v1404
      %v1406 = vpop.f32.mrf.mxu0
      %v1407 = vadd.f32 %v590, %v1406
      %1408 = vmatmul.bf16.gmra.mxu0 %v860
      %v1409 = vpop.f32.mrf.mxu0
      %v1410 = vadd.f32 %v590, %v1409
      %v1411 = vpop.f32.mrf.mxu0
      %v1412 = vadd.f32 %v590, %v1411
      %1413 = vmatmul.bf16.gmra.mxu0 %v863
      %v1414 = vpop.f32.mrf.mxu0
      %v1415 = vadd.f32 %v590, %v1414
      %v1416 = vpop.f32.mrf.mxu0
      %v1417 = vadd.f32 %v590, %v1416
      %1418 = vmatmul.bf16.gmra.mxu0 %v866
      %v1419 = vpop.f32.mrf.mxu0
      %v1420 = vadd.f32 %v590, %v1419
      %v1421 = vpop.f32.mrf.mxu0
      %v1422 = vadd.f32 %v590, %v1421
      %1423 = vmatmul.bf16.gmra.mxu0 %v869
      %v1424 = vpop.f32.mrf.mxu0
      %v1425 = vadd.f32 %v590, %v1424
      %v1426 = vpop.f32.mrf.mxu0
      %v1427 = vadd.f32 %v590, %v1426
      %1428 = vmatmul.bf16.gmra.mxu0 %v872
      %v1429 = vpop.f32.mrf.mxu0
      %v1430 = vadd.f32 %v590, %v1429
      %v1431 = vpop.f32.mrf.mxu0
      %v1432 = vadd.f32 %v590, %v1431
      %1433 = vmatmul.bf16.gmra.mxu0 %v875
      %v1434 = vpop.f32.mrf.mxu0
      %v1435 = vadd.f32 %v590, %v1434
      %v1436 = vpop.f32.mrf.mxu0
      %v1437 = vadd.f32 %v590, %v1436
      %1438 = vmatmul.bf16.gmra.mxu0 %v878
      %v1439 = vpop.f32.mrf.mxu0
      %v1440 = vadd.f32 %v590, %v1439
      %v1441 = vpop.f32.mrf.mxu0
      %v1442 = vadd.f32 %v590, %v1441
      %1443 = vmatmul.bf16.gmra.mxu0 %v881
      %v1444 = vpop.f32.mrf.mxu0
      %v1445 = vadd.f32 %v590, %v1444
      %v1446 = vpop.f32.mrf.mxu0
      %v1447 = vadd.f32 %v590, %v1446
      %1448 = vmatmul.bf16.gmra.mxu0 %v884
      %v1449 = vpop.f32.mrf.mxu0
      %v1450 = vadd.f32 %v590, %v1449
      %v1451 = vpop.f32.mrf.mxu0
      %v1452 = vadd.f32 %v590, %v1451
      %1453 = vmatmul.bf16.gmra.mxu0 %v887
      %v1454 = vpop.f32.mrf.mxu0
      %v1455 = vadd.f32 %v590, %v1454
      %v1456 = vpop.f32.mrf.mxu0
      %v1457 = vadd.f32 %v590, %v1456
      %1458 = vmatmul.bf16.gmra.mxu0 %v890
      %v1459 = vpop.f32.mrf.mxu0
      %v1460 = vadd.f32 %v590, %v1459
      %v1461 = vpop.f32.mrf.mxu0
      %v1462 = vadd.f32 %v590, %v1461
      %1463 = vmatmul.bf16.gmra.mxu0 %v893
      %v1464 = vpop.f32.mrf.mxu0
      %v1465 = vadd.f32 %v590, %v1464
      %v1466 = vpop.f32.mrf.mxu0
      %v1467 = vadd.f32 %v590, %v1466
      %1468 = vmatmul.bf16.gmra.mxu0 %v896
      %v1469 = vpop.f32.mrf.mxu0
      %v1470 = vadd.f32 %v590, %v1469
      %v1471 = vpop.f32.mrf.mxu0
      %v1472 = vadd.f32 %v590, %v1471
      %1473 = vmatmul.bf16.gmra.mxu0 %v899
      %v1474 = vpop.f32.mrf.mxu0
      %v1475 = vadd.f32 %v590, %v1474
      %v1476 = vpop.f32.mrf.mxu0
      %v1477 = vadd.f32 %v590, %v1476
      %1478 = vmatmul.bf16.gmra.mxu0 %v902
      %v1479 = vpop.f32.mrf.mxu0
      %v1480 = vadd.f32 %v590, %v1479
      %v1481 = vpop.f32.mrf.mxu0
      %v1482 = vadd.f32 %v590, %v1481
      %1483 = vmatmul.bf16.gmra.mxu0 %v905
      %v1484 = vpop.f32.mrf.mxu0
      %v1485 = vadd.f32 %v590, %v1484
      %v1486 = vpop.f32.mrf.mxu0
      %v1487 = vadd.f32 %v590, %v1486
      %1488 = vmatmul.bf16.gmra.mxu0 %v908
      %v1489 = vpop.f32.mrf.mxu0
      %v1490 = vadd.f32 %v590, %v1489
      %v1491 = vpop.f32.mrf.mxu0
      %v1492 = vadd.f32 %v590, %v1491
      %1493 = vmatmul.bf16.gmra.mxu0 %v911
      %v1494 = vpop.f32.mrf.mxu0
      %v1495 = vadd.f32 %v590, %v1494
      %v1496 = vpop.f32.mrf.mxu0
      %v1497 = vadd.f32 %v590, %v1496
      %1498 = vmatmul.bf16.gmra.mxu0 %v914
      %v1499 = vpop.f32.mrf.mxu0
      %v1500 = vadd.f32 %v590, %v1499
      %v1501 = vpop.f32.mrf.mxu0
      %v1502 = vadd.f32 %v590, %v1501
      %1503 = vmatmul.bf16.gmra.mxu0 %v917
      %v1504 = vpop.f32.mrf.mxu0
      %v1505 = vadd.f32 %v590, %v1504
      %v1506 = vpop.f32.mrf.mxu0
      %v1507 = vadd.f32 %v590, %v1506
      %1508 = vmatmul.bf16.gmra.mxu0 %v920
      %v1509 = vpop.f32.mrf.mxu0
      %v1510 = vadd.f32 %v590, %v1509
      %v1511 = vpop.f32.mrf.mxu0
      %v1512 = vadd.f32 %v590, %v1511
      %1513 = vmatmul.bf16.gmra.mxu0 %v923
      %v1514 = vpop.f32.mrf.mxu0
      %v1515 = vadd.f32 %v590, %v1514
      %v1516 = vpop.f32.mrf.mxu0
      %v1517 = vadd.f32 %v590, %v1516
      %1518 = vmatmul.bf16.gmra.mxu0 %v926
      %v1519 = vpop.f32.mrf.mxu0
      %v1520 = vadd.f32 %v590, %v1519
      %v1521 = vpop.f32.mrf.mxu0
      %v1522 = vadd.f32 %v590, %v1521
      %1523 = vmatmul.bf16.gmra.mxu0 %v929
      %v1524 = vpop.f32.mrf.mxu0
      %v1525 = vadd.f32 %v590, %v1524
      %v1526 = vpop.f32.mrf.mxu0
      %v1527 = vadd.f32 %v590, %v1526
      %1528 = vmatmul.bf16.gmra.mxu0 %v932
      %v1529 = vpop.f32.mrf.mxu0
      %v1530 = vadd.f32 %v590, %v1529
      %v1531 = vpop.f32.mrf.mxu0
      %v1532 = vadd.f32 %v590, %v1531
      %1533 = vmatmul.bf16.gmra.mxu0 %v935
      %v1534 = vpop.f32.mrf.mxu0
      %v1535 = vadd.f32 %v590, %v1534
      %v1536 = vpop.f32.mrf.mxu0
      %v1537 = vadd.f32 %v590, %v1536
      %1538 = vmatmul.bf16.gmra.mxu0 %v938
      %v1539 = vpop.f32.mrf.mxu0
      %v1540 = vadd.f32 %v590, %v1539
      %v1541 = vpop.f32.mrf.mxu0
      %v1542 = vadd.f32 %v590, %v1541
      %1543 = vmatmul.bf16.gmra.mxu0 %v941
      %v1544 = vpop.f32.mrf.mxu0
      %v1545 = vadd.f32 %v590, %v1544
      %v1546 = vpop.f32.mrf.mxu0
      %v1547 = vadd.f32 %v590, %v1546
      %1548 = vmatmul.bf16.gmra.mxu0 %v944
      %v1549 = vpop.f32.mrf.mxu0
      %v1550 = vadd.f32 %v590, %v1549
      %v1551 = vpop.f32.mrf.mxu0
      %v1552 = vadd.f32 %v590, %v1551
      %1553 = vmatmul.bf16.gmra.mxu0 %v947
      %v1554 = vpop.f32.mrf.mxu0
      %v1555 = vadd.f32 %v590, %v1554
      %v1556 = vpop.f32.mrf.mxu0
      %v1557 = vadd.f32 %v590, %v1556
      %1558 = vmatmul.bf16.gmra.mxu0 %v950
      %v1559 = vpop.f32.mrf.mxu0
      %v1560 = vadd.f32 %v590, %v1559
      %v1561 = vpop.f32.mrf.mxu0
      %v1562 = vadd.f32 %v590, %v1561
      %1563 = vmatmul.bf16.gmra.mxu0 %v953
      %v1564 = vpop.f32.mrf.mxu0
      %v1565 = vadd.f32 %v590, %v1564
      %v1566 = vpop.f32.mrf.mxu0
      %v1567 = vadd.f32 %v590, %v1566
      %1568 = vmatmul.bf16.gmra.mxu0 %v956
      %v1569 = vpop.f32.mrf.mxu0
      %v1570 = vadd.f32 %v590, %v1569
      %v1571 = vpop.f32.mrf.mxu0
      %v1572 = vadd.f32 %v590, %v1571
      %1573 = vdwg.mxu0
      %vm1574 = vcmask 261120
      %1575 = vst.msk [vmem:[%s223] sm:$0xff] %vm1574, %v975
      %1576 = vst.msk [vmem:[%s223 + $0x8] sm:$0xff] %vm1574, %v977
      %1577 = vst.msk [vmem:[%s223 + $0x10] sm:$0xff] %vm1574, %v980
      %1578 = vst.msk [vmem:[%s223 + $0x18] sm:$0xff] %vm1574, %v982
      %1579 = vst.msk [vmem:[%s223 + $0x20] sm:$0xff] %vm1574, %v985
      %1580 = vst.msk [vmem:[%s223 + $0x28] sm:$0xff] %vm1574, %v987
      %1581 = vst.msk [vmem:[%s223 + $0x30] sm:$0xff] %vm1574, %v990
      %1582 = vst.msk [vmem:[%s223 + $0x38] sm:$0xff] %vm1574, %v992
      %1583 = vst.msk [vmem:[%s223 + $0x40] sm:$0xff] %vm1574, %v995
      %1584 = vst.msk [vmem:[%s223 + $0x48] sm:$0xff] %vm1574, %v997
      %1585 = vst.msk [vmem:[%s223 + $0x50] sm:$0xff] %vm1574, %v1000
      %1586 = vst.msk [vmem:[%s223 + $0x58] sm:$0xff] %vm1574, %v1002
      %1587 = vst.msk [vmem:[%s223 + $0x60] sm:$0xff] %vm1574, %v1005
      %1588 = vst.msk [vmem:[%s223 + $0x68] sm:$0xff] %vm1574, %v1007
      %1589 = vst.msk [vmem:[%s223 + $0x70] sm:$0xff] %vm1574, %v1010
      %1590 = vst.msk [vmem:[%s223 + $0x78] sm:$0xff] %vm1574, %v1012
      %1591 = vst.msk [vmem:[%s223 + $0x80] sm:$0xff] %vm1574, %v1015
      %1592 = vst.msk [vmem:[%s223 + $0x88] sm:$0xff] %vm1574, %v1017
      %1593 = vst.msk [vmem:[%s223 + $0x90] sm:$0xff] %vm1574, %v1020
      %1594 = vst.msk [vmem:[%s223 + $0x98] sm:$0xff] %vm1574, %v1022
      %1595 = vst.msk [vmem:[%s223 + $0xa0] sm:$0xff] %vm1574, %v1025
      %1596 = vst.msk [vmem:[%s223 + $0xa8] sm:$0xff] %vm1574, %v1027
      %1597 = vst.msk [vmem:[%s223 + $0xb0] sm:$0xff] %vm1574, %v1030
      %1598 = vst.msk [vmem:[%s223 + $0xb8] sm:$0xff] %vm1574, %v1032
      %1599 = vst.msk [vmem:[%s223 + $0xc0] sm:$0xff] %vm1574, %v1035
      %1600 = vst.msk [vmem:[%s223 + $0xc8] sm:$0xff] %vm1574, %v1037
      %1601 = vst.msk [vmem:[%s223 + $0xd0] sm:$0xff] %vm1574, %v1040
      %1602 = vst.msk [vmem:[%s223 + $0xd8] sm:$0xff] %vm1574, %v1042
      %1603 = vst.msk [vmem:[%s223 + $0xe0] sm:$0xff] %vm1574, %v1045
      %1604 = vst.msk [vmem:[%s223 + $0xe8] sm:$0xff] %vm1574, %v1047
      %1605 = vst.msk [vmem:[%s223 + $0xf0] sm:$0xff] %vm1574, %v1050
      %1606 = vst.msk [vmem:[%s223 + $0xf8] sm:$0xff] %vm1574, %v1052
      %1607 = vst.msk [vmem:[%s223 + $0x100] sm:$0xff] %vm1574, %v1055
      %1608 = vst.msk [vmem:[%s223 + $0x108] sm:$0xff] %vm1574, %v1057
      %1609 = vst.msk [vmem:[%s223 + $0x110] sm:$0xff] %vm1574, %v1060
      %1610 = vst.msk [vmem:[%s223 + $0x118] sm:$0xff] %vm1574, %v1062
      %1611 = vst.msk [vmem:[%s223 + $0x120] sm:$0xff] %vm1574, %v1065
      %1612 = vst.msk [vmem:[%s223 + $0x128] sm:$0xff] %vm1574, %v1067
      %1613 = vst.msk [vmem:[%s223 + $0x130] sm:$0xff] %vm1574, %v1070
      %1614 = vst.msk [vmem:[%s223 + $0x138] sm:$0xff] %vm1574, %v1072
      %1615 = vst.msk [vmem:[%s223 + $0x140] sm:$0xff] %vm1574, %v1075
      %1616 = vst.msk [vmem:[%s223 + $0x148] sm:$0xff] %vm1574, %v1077
      %1617 = vst.msk [vmem:[%s223 + $0x150] sm:$0xff] %vm1574, %v1080
      %1618 = vst.msk [vmem:[%s223 + $0x158] sm:$0xff] %vm1574, %v1082
      %1619 = vst.msk [vmem:[%s223 + $0x160] sm:$0xff] %vm1574, %v1085
      %1620 = vst.msk [vmem:[%s223 + $0x168] sm:$0xff] %vm1574, %v1087
      %1621 = vst.msk [vmem:[%s223 + $0x170] sm:$0xff] %vm1574, %v1090
      %1622 = vst.msk [vmem:[%s223 + $0x178] sm:$0xff] %vm1574, %v1092
      %1623 = vst.msk [vmem:[%s223 + $0x180] sm:$0xff] %vm1574, %v1095
      %1624 = vst.msk [vmem:[%s223 + $0x188] sm:$0xff] %vm1574, %v1097
      %1625 = vst.msk [vmem:[%s223 + $0x190] sm:$0xff] %vm1574, %v1100
      %1626 = vst.msk [vmem:[%s223 + $0x198] sm:$0xff] %vm1574, %v1102
      %1627 = vst.msk [vmem:[%s223 + $0x1a0] sm:$0xff] %vm1574, %v1105
      %1628 = vst.msk [vmem:[%s223 + $0x1a8] sm:$0xff] %vm1574, %v1107
      %1629 = vst.msk [vmem:[%s223 + $0x1b0] sm:$0xff] %vm1574, %v1110
      %1630 = vst.msk [vmem:[%s223 + $0x1b8] sm:$0xff] %vm1574, %v1112
      %1631 = vst.msk [vmem:[%s223 + $0x1c0] sm:$0xff] %vm1574, %v1115
      %1632 = vst.msk [vmem:[%s223 + $0x1c8] sm:$0xff] %vm1574, %v1117
      %1633 = vst.msk [vmem:[%s223 + $0x1d0] sm:$0xff] %vm1574, %v1120
      %1634 = vst.msk [vmem:[%s223 + $0x1d8] sm:$0xff] %vm1574, %v1122
      %1635 = vst.msk [vmem:[%s223 + $0x1e0] sm:$0xff] %vm1574, %v1125
      %1636 = vst.msk [vmem:[%s223 + $0x1e8] sm:$0xff] %vm1574, %v1127
      %1637 = vst.msk [vmem:[%s223 + $0x1f0] sm:$0xff] %vm1574, %v1130
      %1638 = vst.msk [vmem:[%s223 + $0x1f8] sm:$0xff] %vm1574, %v1132
      %1639 = vst.msk [vmem:[%s223 + $0x200] sm:$0xff] %vm1574, %v1135
      %1640 = vst.msk [vmem:[%s223 + $0x208] sm:$0xff] %vm1574, %v1137
      %1641 = vst.msk [vmem:[%s223 + $0x210] sm:$0xff] %vm1574, %v1140
      %1642 = vst.msk [vmem:[%s223 + $0x218] sm:$0xff] %vm1574, %v1142
      %1643 = vst.msk [vmem:[%s223 + $0x220] sm:$0xff] %vm1574, %v1145
      %1644 = vst.msk [vmem:[%s223 + $0x228] sm:$0xff] %vm1574, %v1147
      %1645 = vst.msk [vmem:[%s223 + $0x230] sm:$0xff] %vm1574, %v1150
      %1646 = vst.msk [vmem:[%s223 + $0x238] sm:$0xff] %vm1574, %v1152
      %1647 = vst.msk [vmem:[%s223 + $0x240] sm:$0xff] %vm1574, %v1155
      %1648 = vst.msk [vmem:[%s223 + $0x248] sm:$0xff] %vm1574, %v1157
      %1649 = vst.msk [vmem:[%s223 + $0x250] sm:$0xff] %vm1574, %v1160
      %1650 = vst.msk [vmem:[%s223 + $0x258] sm:$0xff] %vm1574, %v1162
      %1651 = vst.msk [vmem:[%s223 + $0x260] sm:$0xff] %vm1574, %v1165
      %1652 = vst.msk [vmem:[%s223 + $0x268] sm:$0xff] %vm1574, %v1167
      %1653 = vst.msk [vmem:[%s223 + $0x270] sm:$0xff] %vm1574, %v1170
      %1654 = vst.msk [vmem:[%s223 + $0x278] sm:$0xff] %vm1574, %v1172
      %1655 = vst.msk [vmem:[%s223 + $0x280] sm:$0xff] %vm1574, %v1175
      %1656 = vst.msk [vmem:[%s223 + $0x288] sm:$0xff] %vm1574, %v1177
      %1657 = vst.msk [vmem:[%s223 + $0x290] sm:$0xff] %vm1574, %v1180
      %1658 = vst.msk [vmem:[%s223 + $0x298] sm:$0xff] %vm1574, %v1182
      %1659 = vst.msk [vmem:[%s223 + $0x2a0] sm:$0xff] %vm1574, %v1185
      %1660 = vst.msk [vmem:[%s223 + $0x2a8] sm:$0xff] %vm1574, %v1187
      %1661 = vst.msk [vmem:[%s223 + $0x2b0] sm:$0xff] %vm1574, %v1190
      %1662 = vst.msk [vmem:[%s223 + $0x2b8] sm:$0xff] %vm1574, %v1192
      %1663 = vst.msk [vmem:[%s223 + $0x2c0] sm:$0xff] %vm1574, %v1195
      %1664 = vst.msk [vmem:[%s223 + $0x2c8] sm:$0xff] %vm1574, %v1197
      %1665 = vst.msk [vmem:[%s223 + $0x2d0] sm:$0xff] %vm1574, %v1200
      %1666 = vst.msk [vmem:[%s223 + $0x2d8] sm:$0xff] %vm1574, %v1202
      %1667 = vst.msk [vmem:[%s223 + $0x2e0] sm:$0xff] %vm1574, %v1205
      %1668 = vst.msk [vmem:[%s223 + $0x2e8] sm:$0xff] %vm1574, %v1207
      %1669 = vst.msk [vmem:[%s223 + $0x2f0] sm:$0xff] %vm1574, %v1210
      %1670 = vst.msk [vmem:[%s223 + $0x2f8] sm:$0xff] %vm1574, %v1212
      %1671 = vst.msk [vmem:[%s223 + $0x300] sm:$0xff] %vm1574, %v1215
      %1672 = vst.msk [vmem:[%s223 + $0x308] sm:$0xff] %vm1574, %v1217
      %1673 = vst.msk [vmem:[%s223 + $0x310] sm:$0xff] %vm1574, %v1220
      %1674 = vst.msk [vmem:[%s223 + $0x318] sm:$0xff] %vm1574, %v1222
      %1675 = vst.msk [vmem:[%s223 + $0x320] sm:$0xff] %vm1574, %v1225
      %1676 = vst.msk [vmem:[%s223 + $0x328] sm:$0xff] %vm1574, %v1227
      %1677 = vst.msk [vmem:[%s223 + $0x330] sm:$0xff] %vm1574, %v1230
      %1678 = vst.msk [vmem:[%s223 + $0x338] sm:$0xff] %vm1574, %v1232
      %1679 = vst.msk [vmem:[%s223 + $0x340] sm:$0xff] %vm1574, %v1235
      %1680 = vst.msk [vmem:[%s223 + $0x348] sm:$0xff] %vm1574, %v1237
      %1681 = vst.msk [vmem:[%s223 + $0x350] sm:$0xff] %vm1574, %v1240
      %1682 = vst.msk [vmem:[%s223 + $0x358] sm:$0xff] %vm1574, %v1242
      %1683 = vst.msk [vmem:[%s223 + $0x360] sm:$0xff] %vm1574, %v1245
      %1684 = vst.msk [vmem:[%s223 + $0x368] sm:$0xff] %vm1574, %v1247
      %1685 = vst.msk [vmem:[%s223 + $0x370] sm:$0xff] %vm1574, %v1250
      %1686 = vst.msk [vmem:[%s223 + $0x378] sm:$0xff] %vm1574, %v1252
      %1687 = vst.msk [vmem:[%s223 + $0x380] sm:$0xff] %vm1574, %v1255
      %1688 = vst.msk [vmem:[%s223 + $0x388] sm:$0xff] %vm1574, %v1257
      %1689 = vst.msk [vmem:[%s223 + $0x390] sm:$0xff] %vm1574, %v1260
      %1690 = vst.msk [vmem:[%s223 + $0x398] sm:$0xff] %vm1574, %v1262
      %1691 = vst.msk [vmem:[%s223 + $0x3a0] sm:$0xff] %vm1574, %v1265
      %1692 = vst.msk [vmem:[%s223 + $0x3a8] sm:$0xff] %vm1574, %v1267
      %1693 = vst.msk [vmem:[%s223 + $0x3b0] sm:$0xff] %vm1574, %v1270
      %1694 = vst.msk [vmem:[%s223 + $0x3b8] sm:$0xff] %vm1574, %v1272
      %1695 = vst.msk [vmem:[%s223 + $0x3c0] sm:$0xff] %vm1574, %v1275
      %1696 = vst.msk [vmem:[%s223 + $0x3c8] sm:$0xff] %vm1574, %v1277
      %1697 = vst.msk [vmem:[%s223 + $0x3d0] sm:$0xff] %vm1574, %v1280
      %1698 = vst.msk [vmem:[%s223 + $0x3d8] sm:$0xff] %vm1574, %v1282
      %1699 = vst.msk [vmem:[%s223 + $0x3e0] sm:$0xff] %vm1574, %v1285
      %1700 = vst.msk [vmem:[%s223 + $0x3e8] sm:$0xff] %vm1574, %v1287
      %1701 = vst.msk [vmem:[%s223 + $0x3f0] sm:$0xff] %vm1574, %v1290
      %1702 = vst.msk [vmem:[%s223 + $0x3f8] sm:$0xff] %vm1574, %v1292
      %1703 = vst.msk [vmem:[%s223 + $0x400] sm:$0xff] %vm1574, %v1295
      %1704 = vst.msk [vmem:[%s223 + $0x408] sm:$0xff] %vm1574, %v1297
      %1705 = vst.msk [vmem:[%s223 + $0x410] sm:$0xff] %vm1574, %v1300
      %1706 = vst.msk [vmem:[%s223 + $0x418] sm:$0xff] %vm1574, %v1302
      %1707 = vst.msk [vmem:[%s223 + $0x420] sm:$0xff] %vm1574, %v1305
      %1708 = vst.msk [vmem:[%s223 + $0x428] sm:$0xff] %vm1574, %v1307
      %1709 = vst.msk [vmem:[%s223 + $0x430] sm:$0xff] %vm1574, %v1310
      %1710 = vst.msk [vmem:[%s223 + $0x438] sm:$0xff] %vm1574, %v1312
      %1711 = vst.msk [vmem:[%s223 + $0x440] sm:$0xff] %vm1574, %v1315
      %1712 = vst.msk [vmem:[%s223 + $0x448] sm:$0xff] %vm1574, %v1317
      %1713 = vst.msk [vmem:[%s223 + $0x450] sm:$0xff] %vm1574, %v1320
      %1714 = vst.msk [vmem:[%s223 + $0x458] sm:$0xff] %vm1574, %v1322
      %1715 = vst.msk [vmem:[%s223 + $0x460] sm:$0xff] %vm1574, %v1325
      %1716 = vst.msk [vmem:[%s223 + $0x468] sm:$0xff] %vm1574, %v1327
      %1717 = vst.msk [vmem:[%s223 + $0x470] sm:$0xff] %vm1574, %v1330
      %1718 = vst.msk [vmem:[%s223 + $0x478] sm:$0xff] %vm1574, %v1332
      %1719 = vst.msk [vmem:[%s223 + $0x480] sm:$0xff] %vm1574, %v1335
      %1720 = vst.msk [vmem:[%s223 + $0x488] sm:$0xff] %vm1574, %v1337
      %1721 = vst.msk [vmem:[%s223 + $0x490] sm:$0xff] %vm1574, %v1340
      %1722 = vst.msk [vmem:[%s223 + $0x498] sm:$0xff] %vm1574, %v1342
      %1723 = vst.msk [vmem:[%s223 + $0x4a0] sm:$0xff] %vm1574, %v1345
      %1724 = vst.msk [vmem:[%s223 + $0x4a8] sm:$0xff] %vm1574, %v1347
      %1725 = vst.msk [vmem:[%s223 + $0x4b0] sm:$0xff] %vm1574, %v1350
      %1726 = vst.msk [vmem:[%s223 + $0x4b8] sm:$0xff] %vm1574, %v1352
      %1727 = vst.msk [vmem:[%s223 + $0x4c0] sm:$0xff] %vm1574, %v1355
      %1728 = vst.msk [vmem:[%s223 + $0x4c8] sm:$0xff] %vm1574, %v1357
      %1729 = vst.msk [vmem:[%s223 + $0x4d0] sm:$0xff] %vm1574, %v1360
      %1730 = vst.msk [vmem:[%s223 + $0x4d8] sm:$0xff] %vm1574, %v1362
      %1731 = vst.msk [vmem:[%s223 + $0x4e0] sm:$0xff] %vm1574, %v1365
      %1732 = vst.msk [vmem:[%s223 + $0x4e8] sm:$0xff] %vm1574, %v1367
      %1733 = vst.msk [vmem:[%s223 + $0x4f0] sm:$0xff] %vm1574, %v1370
      %1734 = vst.msk [vmem:[%s223 + $0x4f8] sm:$0xff] %vm1574, %v1372
      %1735 = vst.msk [vmem:[%s223 + $0x500] sm:$0xff] %vm1574, %v1375
      %1736 = vst.msk [vmem:[%s223 + $0x508] sm:$0xff] %vm1574, %v1377
      %1737 = vst.msk [vmem:[%s223 + $0x510] sm:$0xff] %vm1574, %v1380
      %1738 = vst.msk [vmem:[%s223 + $0x518] sm:$0xff] %vm1574, %v1382
      %1739 = vst.msk [vmem:[%s223 + $0x520] sm:$0xff] %vm1574, %v1385
      %1740 = vst.msk [vmem:[%s223 + $0x528] sm:$0xff] %vm1574, %v1387
      %1741 = vst.msk [vmem:[%s223 + $0x530] sm:$0xff] %vm1574, %v1390
      %1742 = vst.msk [vmem:[%s223 + $0x538] sm:$0xff] %vm1574, %v1392
      %1743 = vst.msk [vmem:[%s223 + $0x540] sm:$0xff] %vm1574, %v1395
      %1744 = vst.msk [vmem:[%s223 + $0x548] sm:$0xff] %vm1574, %v1397
      %1745 = vst.msk [vmem:[%s223 + $0x550] sm:$0xff] %vm1574, %v1400
      %1746 = vst.msk [vmem:[%s223 + $0x558] sm:$0xff] %vm1574, %v1402
      %1747 = vst.msk [vmem:[%s223 + $0x560] sm:$0xff] %vm1574, %v1405
      %1748 = vst.msk [vmem:[%s223 + $0x568] sm:$0xff] %vm1574, %v1407
      %1749 = vst.msk [vmem:[%s223 + $0x570] sm:$0xff] %vm1574, %v1410
      %1750 = vst.msk [vmem:[%s223 + $0x578] sm:$0xff] %vm1574, %v1412
      %1751 = vst.msk [vmem:[%s223 + $0x580] sm:$0xff] %vm1574, %v1415
      %1752 = vst.msk [vmem:[%s223 + $0x588] sm:$0xff] %vm1574, %v1417
      %1753 = vst.msk [vmem:[%s223 + $0x590] sm:$0xff] %vm1574, %v1420
      %1754 = vst.msk [vmem:[%s223 + $0x598] sm:$0xff] %vm1574, %v1422
      %1755 = vst.msk [vmem:[%s223 + $0x5a0] sm:$0xff] %vm1574, %v1425
      %1756 = vst.msk [vmem:[%s223 + $0x5a8] sm:$0xff] %vm1574, %v1427
      %1757 = vst.msk [vmem:[%s223 + $0x5b0] sm:$0xff] %vm1574, %v1430
      %1758 = vst.msk [vmem:[%s223 + $0x5b8] sm:$0xff] %vm1574, %v1432
      %1759 = vst.msk [vmem:[%s223 + $0x5c0] sm:$0xff] %vm1574, %v1435
      %1760 = vst.msk [vmem:[%s223 + $0x5c8] sm:$0xff] %vm1574, %v1437
      %1761 = vst.msk [vmem:[%s223 + $0x5d0] sm:$0xff] %vm1574, %v1440
      %1762 = vst.msk [vmem:[%s223 + $0x5d8] sm:$0xff] %vm1574, %v1442
      %1763 = vst.msk [vmem:[%s223 + $0x5e0] sm:$0xff] %vm1574, %v1445
      %1764 = vst.msk [vmem:[%s223 + $0x5e8] sm:$0xff] %vm1574, %v1447
      %1765 = vst.msk [vmem:[%s223 + $0x5f0] sm:$0xff] %vm1574, %v1450
      %1766 = vst.msk [vmem:[%s223 + $0x5f8] sm:$0xff] %vm1574, %v1452
      %1767 = vst.msk [vmem:[%s223 + $0x600] sm:$0xff] %vm1574, %v1455
      %1768 = vst.msk [vmem:[%s223 + $0x608] sm:$0xff] %vm1574, %v1457
      %1769 = vst.msk [vmem:[%s223 + $0x610] sm:$0xff] %vm1574, %v1460
      %1770 = vst.msk [vmem:[%s223 + $0x618] sm:$0xff] %vm1574, %v1462
      %1771 = vst.msk [vmem:[%s223 + $0x620] sm:$0xff] %vm1574, %v1465
      %1772 = vst.msk [vmem:[%s223 + $0x628] sm:$0xff] %vm1574, %v1467
      %1773 = vst.msk [vmem:[%s223 + $0x630] sm:$0xff] %vm1574, %v1470
      %1774 = vst.msk [vmem:[%s223 + $0x638] sm:$0xff] %vm1574, %v1472
      %1775 = vst.msk [vmem:[%s223 + $0x640] sm:$0xff] %vm1574, %v1475
      %1776 = vst.msk [vmem:[%s223 + $0x648] sm:$0xff] %vm1574, %v1477
      %1777 = vst.msk [vmem:[%s223 + $0x650] sm:$0xff] %vm1574, %v1480
      %1778 = vst.msk [vmem:[%s223 + $0x658] sm:$0xff] %vm1574, %v1482
      %1779 = vst.msk [vmem:[%s223 + $0x660] sm:$0xff] %vm1574, %v1485
      %1780 = vst.msk [vmem:[%s223 + $0x668] sm:$0xff] %vm1574, %v1487
      %1781 = vst.msk [vmem:[%s223 + $0x670] sm:$0xff] %vm1574, %v1490
      %1782 = vst.msk [vmem:[%s223 + $0x678] sm:$0xff] %vm1574, %v1492
      %1783 = vst.msk [vmem:[%s223 + $0x680] sm:$0xff] %vm1574, %v1495
      %1784 = vst.msk [vmem:[%s223 + $0x688] sm:$0xff] %vm1574, %v1497
      %1785 = vst.msk [vmem:[%s223 + $0x690] sm:$0xff] %vm1574, %v1500
      %1786 = vst.msk [vmem:[%s223 + $0x698] sm:$0xff] %vm1574, %v1502
      %1787 = vst.msk [vmem:[%s223 + $0x6a0] sm:$0xff] %vm1574, %v1505
      %1788 = vst.msk [vmem:[%s223 + $0x6a8] sm:$0xff] %vm1574, %v1507
      %1789 = vst.msk [vmem:[%s223 + $0x6b0] sm:$0xff] %vm1574, %v1510
      %1790 = vst.msk [vmem:[%s223 + $0x6b8] sm:$0xff] %vm1574, %v1512
      %1791 = vst.msk [vmem:[%s223 + $0x6c0] sm:$0xff] %vm1574, %v1515
      %1792 = vst.msk [vmem:[%s223 + $0x6c8] sm:$0xff] %vm1574, %v1517
      %1793 = vst.msk [vmem:[%s223 + $0x6d0] sm:$0xff] %vm1574, %v1520
      %1794 = vst.msk [vmem:[%s223 + $0x6d8] sm:$0xff] %vm1574, %v1522
      %1795 = vst.msk [vmem:[%s223 + $0x6e0] sm:$0xff] %vm1574, %v1525
      %1796 = vst.msk [vmem:[%s223 + $0x6e8] sm:$0xff] %vm1574, %v1527
      %1797 = vst.msk [vmem:[%s223 + $0x6f0] sm:$0xff] %vm1574, %v1530
      %1798 = vst.msk [vmem:[%s223 + $0x6f8] sm:$0xff] %vm1574, %v1532
      %1799 = vst.msk [vmem:[%s223 + $0x700] sm:$0xff] %vm1574, %v1535
      %1800 = vst.msk [vmem:[%s223 + $0x708] sm:$0xff] %vm1574, %v1537
      %1801 = vst.msk [vmem:[%s223 + $0x710] sm:$0xff] %vm1574, %v1540
      %1802 = vst.msk [vmem:[%s223 + $0x718] sm:$0xff] %vm1574, %v1542
      %1803 = vst.msk [vmem:[%s223 + $0x720] sm:$0xff] %vm1574, %v1545
      %1804 = vst.msk [vmem:[%s223 + $0x728] sm:$0xff] %vm1574, %v1547
      %1805 = vst.msk [vmem:[%s223 + $0x730] sm:$0xff] %vm1574, %v1550
      %1806 = vst.msk [vmem:[%s223 + $0x738] sm:$0xff] %vm1574, %v1552
      %1807 = vst.msk [vmem:[%s223 + $0x740] sm:$0xff] %vm1574, %v1555
      %1808 = vst.msk [vmem:[%s223 + $0x748] sm:$0xff] %vm1574, %v1557
      %1809 = vst.msk [vmem:[%s223 + $0x750] sm:$0xff] %vm1574, %v1560
      %1810 = vst.msk [vmem:[%s223 + $0x758] sm:$0xff] %vm1574, %v1562
      %1811 = vst.msk [vmem:[%s223 + $0x760] sm:$0xff] %vm1574, %v1565
      %1812 = vst.msk [vmem:[%s223 + $0x768] sm:$0xff] %vm1574, %v1567
      %1813 = vst.msk [vmem:[%s223 + $0x770] sm:$0xff] %vm1574, %v1570
      %1814 = vst.msk [vmem:[%s223 + $0x778] sm:$0xff] %vm1574, %v1572
      %s1815 = smul.u32 240, %s18
      %p1816 = scmp.lt.s32.totalorder %s1815, 3599
      %s1817 = scalar_select %p1816, %s1815, 3599
      %p1818 = scmp.lt.s32.totalorder %s19, 0
      %s1819 = scalar_select %p1818, %s19, 0
      %s1820 = sadd.s32 %s1819, %s1817
      %s1821 = smul.addr %s1820, 8
      %s1822 = scalar_lea.vmem %s3, %s1821
      // Predicated region
      $region33: #{tpu_custom_call.1} parent=31 // pred_check
        %p1823 = pneg %p124
      $region34: #{tpu_custom_call.1} parent=31 // pred_check_branch
        %1825 = sbr.rel (%p1823) target = $region36
      $region35: #{tpu_custom_call.1} parent=31 // pred_region
        %s1826 = smul.u32 240, %s18
      $region36: #{tpu_custom_call.1} parent=31 // pred_fallthru
        _
    $region32: #{tpu_custom_call.1} parent=5 // pred_fallthru
      _
    %p1827 = scmp.le.s32.totalorder 2, %s9
    // Predicated region
    $region37: #{tpu_custom_call.1} parent=5 // pred_check
      %p1828 = pneg %p1827
    $region38: #{tpu_custom_call.1} parent=5 // pred_check_branch
      %1830 = sbr.rel (%p1828) target = $region40
    $region39: #{tpu_custom_call.1} parent=5 // pred_region
      %s1831 = ssub.s32 %s9, 2
      // Predicated region
      $region41: #{tpu_custom_call.1} parent=39 // pred_check
        %p1832 = pneg %p130
      $region42: #{tpu_custom_call.1} parent=39 // pred_check_branch
        %1834 = sbr.rel (%p1832) target = $region44
      $region43: #{tpu_custom_call.1} parent=39 // pred_region
        %s1835 = smul.u32 240, %s20
        %p1836 = scmp.lt.s32.totalorder %s1835, 3599
        %s1837 = scalar_select %p1836, %s1835, 3599
        %p1838 = scmp.lt.s32.totalorder %s21, 0
        %s1839 = scalar_select %p1838, %s21, 0
        %s1840 = sadd.s32 %s1839, %s1837
        %s1841 = smul.addr %s1840, 8
        %s1842 = scalar_lea.vmem %s3, %s1841
      $region44: #{tpu_custom_call.1} parent=39 // pred_fallthru
        _
    $region40: #{tpu_custom_call.1} parent=5 // pred_fallthru
      _
  $region6: #{tpu_custom_call.1} parent=0 // loop_footer
    %s13 = sadd.s32 1, %s9
  $region7: #{tpu_custom_call.1} parent=0 // loop_footer_branch
    %8 = sbr.rel target = $region3
  $region8: #{tpu_custom_call.1} parent=0 // loop_exit
    _

</llo_original>
